<compile_context>
chip_gen: v7x
topology: tpu7x:2x2x1
jax: 0.10.0
libtpu: 0.0.40
codegen_flags: <defaults>
</compile_context>

<pallas_src>
import jax
import jax.numpy as jnp
from jax.experimental import pallas as pl
from jax.experimental.pallas import tpu as pltpu


def rnn_kernel(x_ref, wih_ref, whh_ref, b_ref, wfc_ref, bfc_ref, out_ref, xp_ref):
    """Single-invocation RNN forward.

    x_ref:   (B*T, F)  batch-major rows (row b*T + t == x[b, t, :]), VMEM
    wih_ref: (F, H)    W_ih^T
    whh_ref: (H, H)    W_hh^T
    b_ref:   (1, H)    b_ih + b_hh
    wfc_ref: (H, 10)   W_fc^T
    bfc_ref: (1, 10)   b_fc
    out_ref: (B, 10)
    xp_ref:  (B*T, H)  VMEM scratch holding the hoisted input projection
    """
    BT = x_ref.shape[0]
    H = whh_ref.shape[0]
    B = out_ref.shape[0]
    T = BT // B

    # Hoisted input projection for every (b, t) row at once: one well-shaped MXU
    # matmul, completely off the serial dependency chain. The result lives in
    # VMEM scratch (not vregs), so the unrolled recurrence below carries almost
    # no vector-register pressure.
    xp_ref[...] = (
        jnp.dot(x_ref[...], wih_ref[...], preferred_element_type=jnp.float32)
        + b_ref[...]
    )

    # W_hh is loop-invariant: keep it resident in vregs across the recurrence.
    # (Explicit MXU push/acc/pop weight-stationary path deliberately skipped —
    # see header comment.)
    whh = whh_ref[...]

    # Recurrence: only (B,H)@(H,H) + add + tanh sits on the serial chain.
    # Static Python loop == fully unrolled, so the scheduler sees the whole
    # chain; h (B,H) stays in vregs. Each step's addend is a strided VMEM read
    # (rows {b*T + t}) that does not depend on h and can be issued early.
    h = jnp.zeros((B, H), jnp.float32)
    for t in range(T):
        x_t = xp_ref[pl.ds(t, B, stride=T), :]   # time-t rows, all batches
        h = jnp.tanh(x_t + jnp.dot(h, whh, preferred_element_type=jnp.float32))

    # Final classifier on the last hidden state (== fc(all steps)[:, -1]).
    out_ref[...] = (
        jnp.dot(h, wfc_ref[...], preferred_element_type=jnp.float32) + bfc_ref[...]
    )


def rnn_forward(x_nchw, params):
    """x_nchw: [B, C, 28, 28] float32. Returns [B, 10]."""
    w_ih, w_hh, b_ih, b_hh, w_fc, b_fc = params
    B = x_nchw.shape[0]
    # Match PyTorch: x[:, 0] -> [B, T, F]. Keep batch-major and just flatten
    # (contiguous reshape -> no data movement, no wrapper transpose op). The
    # kernel performs the time-major gather with strided VMEM reads.
    x_seq = x_nchw[:, 0].astype(jnp.float32)              # [B, T, F]
    _, T, F = x_seq.shape
    x_flat = x_seq.reshape(B * T, F)                      # row b*T + t == x[b, t]
    H = w_ih.shape[0]
    n_cls = w_fc.shape[0]

    wih_t = jnp.transpose(w_ih).astype(jnp.float32)          # [F, H]
    whh_t = jnp.transpose(w_hh).astype(jnp.float32)          # [H, H]
    b = (b_ih + b_hh).reshape(1, H).astype(jnp.float32)      # [1, H]
    wfc_t = jnp.transpose(w_fc).astype(jnp.float32)          # [H, 10]
    bfc = b_fc.reshape(1, n_cls).astype(jnp.float32)         # [1, 10]

    # Grid-less single invocation: every operand (~15 KB total) is mapped whole
    # into VMEM; the time loop lives inside the kernel. No tiling, buffering, or
    # megacore sharding — the kernel is latency-bound on the serial recurrence.
    out = pl.pallas_call(
        rnn_kernel,
        out_shape=jax.ShapeDtypeStruct((B, n_cls), jnp.float32),
        scratch_shapes=[pltpu.VMEM((B * T, H), jnp.float32)],
    )(x_flat, wih_t, whh_t, b, wfc_t, bfc)
    return out


def rnn_reference(x_nchw, params):
    """Plain-JAX reference mirroring the PyTorch forward."""
    w_ih, w_hh, b_ih, b_hh, w_fc, b_fc = params
    x_seq = x_nchw[:, 0].astype(jnp.float32)  # [B, T, F]
    B, T, F = x_seq.shape
    H = w_ih.shape[0]
    h = jnp.zeros((B, H), jnp.float32)
    for t in range(T):
        h = jnp.tanh(x_seq[:, t] @ w_ih.T + b_ih + h @ w_hh.T + b_hh)
    return h @ w_fc.T + b_fc  # == fc(all steps)[:, -1]


def init_params(key, hidden_dim):
    F_in, n_cls = 28, 10
    k1, k2, k3, k4, k5, k6 = jax.random.split(key, 6)
    s = 1.0 / jnp.sqrt(hidden_dim)
    w_ih = jax.random.uniform(k1, (hidden_dim, F_in), jnp.float32, -s, s)
    w_hh = jax.random.uniform(k2, (hidden_dim, hidden_dim), jnp.float32, -s, s)
    b_ih = jax.random.uniform(k3, (hidden_dim,), jnp.float32, -s, s)
    b_hh = jax.random.uniform(k4, (hidden_dim,), jnp.float32, -s, s)
    w_fc = jax.random.uniform(k5, (n_cls, hidden_dim), jnp.float32, -s, s)
    b_fc = jax.random.uniform(k6, (n_cls,), jnp.float32, -s, s)
    return (w_ih, w_hh, b_ih, b_hh, w_fc, b_fc)


if __name__ == "__main__":
    key = jax.random.PRNGKey(0)
    kx, kp = jax.random.split(key)
    B, C, HW = 2, 1, 28          # MNIST-like NCHW input, as the forward implies
    hidden_dim = 32
    x = jax.random.normal(kx, (B, C, HW, HW), jnp.float32)
    params = init_params(kp, hidden_dim)

    out = jax.jit(rnn_forward)(x, params)
    out = jax.block_until_ready(out)

    ref = rnn_reference(x, params)
    assert out.shape == (B, 10)
    assert jnp.allclose(out, ref, atol=1e-4, rtol=1e-4)
    print("KERNEL_OK")
</pallas_src>

<mosaic_0001>
module attributes {stable_mosaic.version = 11 : i64} {
  func.func @rnn_kernel(%arg0: memref<56x28xf32, #tpu.memory_space<vmem>>, %arg1: memref<28x32xf32, #tpu.memory_space<vmem>>, %arg2: memref<32x32xf32, #tpu.memory_space<vmem>>, %arg3: memref<1x32xf32, #tpu.memory_space<vmem>>, %arg4: memref<32x10xf32, #tpu.memory_space<vmem>>, %arg5: memref<1x10xf32, #tpu.memory_space<vmem>>, %arg6: memref<2x10xf32, #tpu.memory_space<vmem>>, %arg7: memref<56x32xf32, #tpu.memory_space<vmem>>) attributes {dimension_semantics = [], scalar_prefetch = 0 : i64, scratch_operands = 1 : i64, tpu.core_type = #tpu.core_type<tc>} {
    %c0 = arith.constant 0 : index
    %c0_0 = arith.constant 0 : index
    %0 = vector.load %arg0[%c0, %c0_0] : memref<56x28xf32, #tpu.memory_space<vmem>>, vector<56x28xf32>
    %c0_1 = arith.constant 0 : index
    %c0_2 = arith.constant 0 : index
    %1 = vector.load %arg1[%c0_1, %c0_2] : memref<28x32xf32, #tpu.memory_space<vmem>>, vector<28x32xf32>
    %cst = arith.constant dense<0.000000e+00> : vector<56x32xf32>
    %2 = tpu.matmul %0, %1, %cst {dimension_numbers = #tpu.dot_dimension_numbers<[1], [0], [0], [1], [0, 0, 1, 1], [], []>} : vector<56x28xf32>, vector<28x32xf32>, vector<56x32xf32> -> vector<56x32xf32>
    %c0_3 = arith.constant 0 : index
    %c0_4 = arith.constant 0 : index
    %3 = vector.load %arg3[%c0_3, %c0_4] : memref<1x32xf32, #tpu.memory_space<vmem>>, vector<1x32xf32>
    %4 = vector.broadcast %3 : vector<1x32xf32> to vector<56x32xf32>
    %5 = arith.addf %2, %4 : vector<56x32xf32>
    %c0_5 = arith.constant 0 : index
    %c0_6 = arith.constant 0 : index
    %6 = vector.load %arg7[%c0_5, %c0_6] : memref<56x32xf32, #tpu.memory_space<vmem>>, vector<56x32xf32>
    tpu.vector_store %arg7[%c0_5, %c0_6], %5 {strides = array<i32>} : memref<56x32xf32, #tpu.memory_space<vmem>>, vector<56x32xf32>,
    %c0_7 = arith.constant 0 : index
    %c0_8 = arith.constant 0 : index
    %7 = vector.load %arg2[%c0_7, %c0_8] : memref<32x32xf32, #tpu.memory_space<vmem>>, vector<32x32xf32>
    %cst_9 = arith.constant 0.000000e+00 : f32
    %8 = vector.broadcast %cst_9 : f32 to vector<2x32xf32>
    %c0_10 = arith.constant 0 : index
    %c0_11 = arith.constant 0 : index
    %9 = tpu.strided_load %arg7[%c0_10, %c0_11] {strides = array<i32: 28, 1>} : memref<56x32xf32, #tpu.memory_space<vmem>>, vector<2x32xf32>
    %cst_12 = arith.constant dense<0.000000e+00> : vector<2x32xf32>
    %10 = tpu.matmul %8, %7, %cst_12 {dimension_numbers = #tpu.dot_dimension_numbers<[1], [0], [0], [1], [0, 0, 1, 1], [], []>} : vector<2x32xf32>, vector<32x32xf32>, vector<2x32xf32> -> vector<2x32xf32>
    %11 = arith.addf %9, %10 : vector<2x32xf32>
    %12 = math.tanh %11 : vector<2x32xf32>
    %c1 = arith.constant 1 : index
    %c0_13 = arith.constant 0 : index
    %13 = tpu.strided_load %arg7[%c1, %c0_13] {strides = array<i32: 28, 1>} : memref<56x32xf32, #tpu.memory_space<vmem>>, vector<2x32xf32>
    %cst_14 = arith.constant dense<0.000000e+00> : vector<2x32xf32>
    %14 = tpu.matmul %12, %7, %cst_14 {dimension_numbers = #tpu.dot_dimension_numbers<[1], [0], [0], [1], [0, 0, 1, 1], [], []>} : vector<2x32xf32>, vector<32x32xf32>, vector<2x32xf32> -> vector<2x32xf32>
    %15 = arith.addf %13, %14 : vector<2x32xf32>
    %16 = math.tanh %15 : vector<2x32xf32>
    %c2 = arith.constant 2 : index
    %c0_15 = arith.constant 0 : index
    %17 = tpu.strided_load %arg7[%c2, %c0_15] {strides = array<i32: 28, 1>} : memref<56x32xf32, #tpu.memory_space<vmem>>, vector<2x32xf32>
    %cst_16 = arith.constant dense<0.000000e+00> : vector<2x32xf32>
    %18 = tpu.matmul %16, %7, %cst_16 {dimension_numbers = #tpu.dot_dimension_numbers<[1], [0], [0], [1], [0, 0, 1, 1], [], []>} : vector<2x32xf32>, vector<32x32xf32>, vector<2x32xf32> -> vector<2x32xf32>
    %19 = arith.addf %17, %18 : vector<2x32xf32>
    %20 = math.tanh %19 : vector<2x32xf32>
    %c3 = arith.constant 3 : index
    %c0_17 = arith.constant 0 : index
    %21 = tpu.strided_load %arg7[%c3, %c0_17] {strides = array<i32: 28, 1>} : memref<56x32xf32, #tpu.memory_space<vmem>>, vector<2x32xf32>
    %cst_18 = arith.constant dense<0.000000e+00> : vector<2x32xf32>
    %22 = tpu.matmul %20, %7, %cst_18 {dimension_numbers = #tpu.dot_dimension_numbers<[1], [0], [0], [1], [0, 0, 1, 1], [], []>} : vector<2x32xf32>, vector<32x32xf32>, vector<2x32xf32> -> vector<2x32xf32>
    %23 = arith.addf %21, %22 : vector<2x32xf32>
    %24 = math.tanh %23 : vector<2x32xf32>
    %c4 = arith.constant 4 : index
    %c0_19 = arith.constant 0 : index
    %25 = tpu.strided_load %arg7[%c4, %c0_19] {strides = array<i32: 28, 1>} : memref<56x32xf32, #tpu.memory_space<vmem>>, vector<2x32xf32>
    %cst_20 = arith.constant dense<0.000000e+00> : vector<2x32xf32>
    %26 = tpu.matmul %24, %7, %cst_20 {dimension_numbers = #tpu.dot_dimension_numbers<[1], [0], [0], [1], [0, 0, 1, 1], [], []>} : vector<2x32xf32>, vector<32x32xf32>, vector<2x32xf32> -> vector<2x32xf32>
    %27 = arith.addf %25, %26 : vector<2x32xf32>
    %28 = math.tanh %27 : vector<2x32xf32>
    %c5 = arith.constant 5 : index
    %c0_21 = arith.constant 0 : index
    %29 = tpu.strided_load %arg7[%c5, %c0_21] {strides = array<i32: 28, 1>} : memref<56x32xf32, #tpu.memory_space<vmem>>, vector<2x32xf32>
    %cst_22 = arith.constant dense<0.000000e+00> : vector<2x32xf32>
    %30 = tpu.matmul %28, %7, %cst_22 {dimension_numbers = #tpu.dot_dimension_numbers<[1], [0], [0], [1], [0, 0, 1, 1], [], []>} : vector<2x32xf32>, vector<32x32xf32>, vector<2x32xf32> -> vector<2x32xf32>
    %31 = arith.addf %29, %30 : vector<2x32xf32>
    %32 = math.tanh %31 : vector<2x32xf32>
    %c6 = arith.constant 6 : index
    %c0_23 = arith.constant 0 : index
    %33 = tpu.strided_load %arg7[%c6, %c0_23] {strides = array<i32: 28, 1>} : memref<56x32xf32, #tpu.memory_space<vmem>>, vector<2x32xf32>
    %cst_24 = arith.constant dense<0.000000e+00> : vector<2x32xf32>
    %34 = tpu.matmul %32, %7, %cst_24 {dimension_numbers = #tpu.dot_dimension_numbers<[1], [0], [0], [1], [0, 0, 1, 1], [], []>} : vector<2x32xf32>, vector<32x32xf32>, vector<2x32xf32> -> vector<2x32xf32>
    %35 = arith.addf %33, %34 : vector<2x32xf32>
    %36 = math.tanh %35 : vector<2x32xf32>
    %c7 = arith.constant 7 : index
    %c0_25 = arith.constant 0 : index
    %37 = tpu.strided_load %arg7[%c7, %c0_25] {strides = array<i32: 28, 1>} : memref<56x32xf32, #tpu.memory_space<vmem>>, vector<2x32xf32>
    %cst_26 = arith.constant dense<0.000000e+00> : vector<2x32xf32>
    %38 = tpu.matmul %36, %7, %cst_26 {dimension_numbers = #tpu.dot_dimension_numbers<[1], [0], [0], [1], [0, 0, 1, 1], [], []>} : vector<2x32xf32>, vector<32x32xf32>, vector<2x32xf32> -> vector<2x32xf32>
    %39 = arith.addf %37, %38 : vector<2x32xf32>
    %40 = math.tanh %39 : vector<2x32xf32>
    %c8 = arith.constant 8 : index
    %c0_27 = arith.constant 0 : index
    %41 = tpu.strided_load %arg7[%c8, %c0_27] {strides = array<i32: 28, 1>} : memref<56x32xf32, #tpu.memory_space<vmem>>, vector<2x32xf32>
    %cst_28 = arith.constant dense<0.000000e+00> : vector<2x32xf32>
    %42 = tpu.matmul %40, %7, %cst_28 {dimension_numbers = #tpu.dot_dimension_numbers<[1], [0], [0], [1], [0, 0, 1, 1], [], []>} : vector<2x32xf32>, vector<32x32xf32>, vector<2x32xf32> -> vector<2x32xf32>
    %43 = arith.addf %41, %42 : vector<2x32xf32>
    %44 = math.tanh %43 : vector<2x32xf32>
    %c9 = arith.constant 9 : index
    %c0_29 = arith.constant 0 : index
    %45 = tpu.strided_load %arg7[%c9, %c0_29] {strides = array<i32: 28, 1>} : memref<56x32xf32, #tpu.memory_space<vmem>>, vector<2x32xf32>
    %cst_30 = arith.constant dense<0.000000e+00> : vector<2x32xf32>
    %46 = tpu.matmul %44, %7, %cst_30 {dimension_numbers = #tpu.dot_dimension_numbers<[1], [0], [0], [1], [0, 0, 1, 1], [], []>} : vector<2x32xf32>, vector<32x32xf32>, vector<2x32xf32> -> vector<2x32xf32>
    %47 = arith.addf %45, %46 : vector<2x32xf32>
    %48 = math.tanh %47 : vector<2x32xf32>
    %c10 = arith.constant 10 : index
    %c0_31 = arith.constant 0 : index
    %49 = tpu.strided_load %arg7[%c10, %c0_31] {strides = array<i32: 28, 1>} : memref<56x32xf32, #tpu.memory_space<vmem>>, vector<2x32xf32>
    %cst_32 = arith.constant dense<0.000000e+00> : vector<2x32xf32>
    %50 = tpu.matmul %48, %7, %cst_32 {dimension_numbers = #tpu.dot_dimension_numbers<[1], [0], [0], [1], [0, 0, 1, 1], [], []>} : vector<2x32xf32>, vector<32x32xf32>, vector<2x32xf32> -> vector<2x32xf32>
    %51 = arith.addf %49, %50 : vector<2x32xf32>
    %52 = math.tanh %51 : vector<2x32xf32>
    %c11 = arith.constant 11 : index
    %c0_33 = arith.constant 0 : index
    %53 = tpu.strided_load %arg7[%c11, %c0_33] {strides = array<i32: 28, 1>} : memref<56x32xf32, #tpu.memory_space<vmem>>, vector<2x32xf32>
    %cst_34 = arith.constant dense<0.000000e+00> : vector<2x32xf32>
    %54 = tpu.matmul %52, %7, %cst_34 {dimension_numbers = #tpu.dot_dimension_numbers<[1], [0], [0], [1], [0, 0, 1, 1], [], []>} : vector<2x32xf32>, vector<32x32xf32>, vector<2x32xf32> -> vector<2x32xf32>
    %55 = arith.addf %53, %54 : vector<2x32xf32>
    %56 = math.tanh %55 : vector<2x32xf32>
    %c12 = arith.constant 12 : index
    %c0_35 = arith.constant 0 : index
    %57 = tpu.strided_load %arg7[%c12, %c0_35] {strides = array<i32: 28, 1>} : memref<56x32xf32, #tpu.memory_space<vmem>>, vector<2x32xf32>
    %cst_36 = arith.constant dense<0.000000e+00> : vector<2x32xf32>
    %58 = tpu.matmul %56, %7, %cst_36 {dimension_numbers = #tpu.dot_dimension_numbers<[1], [0], [0], [1], [0, 0, 1, 1], [], []>} : vector<2x32xf32>, vector<32x32xf32>, vector<2x32xf32> -> vector<2x32xf32>
    %59 = arith.addf %57, %58 : vector<2x32xf32>
    %60 = math.tanh %59 : vector<2x32xf32>
    %c13 = arith.constant 13 : index
    %c0_37 = arith.constant 0 : index
    %61 = tpu.strided_load %arg7[%c13, %c0_37] {strides = array<i32: 28, 1>} : memref<56x32xf32, #tpu.memory_space<vmem>>, vector<2x32xf32>
    %cst_38 = arith.constant dense<0.000000e+00> : vector<2x32xf32>
    %62 = tpu.matmul %60, %7, %cst_38 {dimension_numbers = #tpu.dot_dimension_numbers<[1], [0], [0], [1], [0, 0, 1, 1], [], []>} : vector<2x32xf32>, vector<32x32xf32>, vector<2x32xf32> -> vector<2x32xf32>
    %63 = arith.addf %61, %62 : vector<2x32xf32>
    %64 = math.tanh %63 : vector<2x32xf32>
    %c14 = arith.constant 14 : index
    %c0_39 = arith.constant 0 : index
    %65 = tpu.strided_load %arg7[%c14, %c0_39] {strides = array<i32: 28, 1>} : memref<56x32xf32, #tpu.memory_space<vmem>>, vector<2x32xf32>
    %cst_40 = arith.constant dense<0.000000e+00> : vector<2x32xf32>
    %66 = tpu.matmul %64, %7, %cst_40 {dimension_numbers = #tpu.dot_dimension_numbers<[1], [0], [0], [1], [0, 0, 1, 1], [], []>} : vector<2x32xf32>, vector<32x32xf32>, vector<2x32xf32> -> vector<2x32xf32>
    %67 = arith.addf %65, %66 : vector<2x32xf32>
    %68 = math.tanh %67 : vector<2x32xf32>
    %c15 = arith.constant 15 : index
    %c0_41 = arith.constant 0 : index
    %69 = tpu.strided_load %arg7[%c15, %c0_41] {strides = array<i32: 28, 1>} : memref<56x32xf32, #tpu.memory_space<vmem>>, vector<2x32xf32>
    %cst_42 = arith.constant dense<0.000000e+00> : vector<2x32xf32>
    %70 = tpu.matmul %68, %7, %cst_42 {dimension_numbers = #tpu.dot_dimension_numbers<[1], [0], [0], [1], [0, 0, 1, 1], [], []>} : vector<2x32xf32>, vector<32x32xf32>, vector<2x32xf32> -> vector<2x32xf32>
    %71 = arith.addf %69, %70 : vector<2x32xf32>
    %72 = math.tanh %71 : vector<2x32xf32>
    %c16 = arith.constant 16 : index
    %c0_43 = arith.constant 0 : index
    %73 = tpu.strided_load %arg7[%c16, %c0_43] {strides = array<i32: 28, 1>} : memref<56x32xf32, #tpu.memory_space<vmem>>, vector<2x32xf32>
    %cst_44 = arith.constant dense<0.000000e+00> : vector<2x32xf32>
    %74 = tpu.matmul %72, %7, %cst_44 {dimension_numbers = #tpu.dot_dimension_numbers<[1], [0], [0], [1], [0, 0, 1, 1], [], []>} : vector<2x32xf32>, vector<32x32xf32>, vector<2x32xf32> -> vector<2x32xf32>
    %75 = arith.addf %73, %74 : vector<2x32xf32>
    %76 = math.tanh %75 : vector<2x32xf32>
    %c17 = arith.constant 17 : index
    %c0_45 = arith.constant 0 : index
    %77 = tpu.strided_load %arg7[%c17, %c0_45] {strides = array<i32: 28, 1>} : memref<56x32xf32, #tpu.memory_space<vmem>>, vector<2x32xf32>
    %cst_46 = arith.constant dense<0.000000e+00> : vector<2x32xf32>
    %78 = tpu.matmul %76, %7, %cst_46 {dimension_numbers = #tpu.dot_dimension_numbers<[1], [0], [0], [1], [0, 0, 1, 1], [], []>} : vector<2x32xf32>, vector<32x32xf32>, vector<2x32xf32> -> vector<2x32xf32>
    %79 = arith.addf %77, %78 : vector<2x32xf32>
    %80 = math.tanh %79 : vector<2x32xf32>
    %c18 = arith.constant 18 : index
    %c0_47 = arith.constant 0 : index
    %81 = tpu.strided_load %arg7[%c18, %c0_47] {strides = array<i32: 28, 1>} : memref<56x32xf32, #tpu.memory_space<vmem>>, vector<2x32xf32>
    %cst_48 = arith.constant dense<0.000000e+00> : vector<2x32xf32>
    %82 = tpu.matmul %80, %7, %cst_48 {dimension_numbers = #tpu.dot_dimension_numbers<[1], [0], [0], [1], [0, 0, 1, 1], [], []>} : vector<2x32xf32>, vector<32x32xf32>, vector<2x32xf32> -> vector<2x32xf32>
    %83 = arith.addf %81, %82 : vector<2x32xf32>
    %84 = math.tanh %83 : vector<2x32xf32>
    %c19 = arith.constant 19 : index
    %c0_49 = arith.constant 0 : index
    %85 = tpu.strided_load %arg7[%c19, %c0_49] {strides = array<i32: 28, 1>} : memref<56x32xf32, #tpu.memory_space<vmem>>, vector<2x32xf32>
    %cst_50 = arith.constant dense<0.000000e+00> : vector<2x32xf32>
    %86 = tpu.matmul %84, %7, %cst_50 {dimension_numbers = #tpu.dot_dimension_numbers<[1], [0], [0], [1], [0, 0, 1, 1], [], []>} : vector<2x32xf32>, vector<32x32xf32>, vector<2x32xf32> -> vector<2x32xf32>
    %87 = arith.addf %85, %86 : vector<2x32xf32>
    %88 = math.tanh %87 : vector<2x32xf32>
    %c20 = arith.constant 20 : index
    %c0_51 = arith.constant 0 : index
    %89 = tpu.strided_load %arg7[%c20, %c0_51] {strides = array<i32: 28, 1>} : memref<56x32xf32, #tpu.memory_space<vmem>>, vector<2x32xf32>
    %cst_52 = arith.constant dense<0.000000e+00> : vector<2x32xf32>
    %90 = tpu.matmul %88, %7, %cst_52 {dimension_numbers = #tpu.dot_dimension_numbers<[1], [0], [0], [1], [0, 0, 1, 1], [], []>} : vector<2x32xf32>, vector<32x32xf32>, vector<2x32xf32> -> vector<2x32xf32>
    %91 = arith.addf %89, %90 : vector<2x32xf32>
    %92 = math.tanh %91 : vector<2x32xf32>
    %c21 = arith.constant 21 : index
    %c0_53 = arith.constant 0 : index
    %93 = tpu.strided_load %arg7[%c21, %c0_53] {strides = array<i32: 28, 1>} : memref<56x32xf32, #tpu.memory_space<vmem>>, vector<2x32xf32>
    %cst_54 = arith.constant dense<0.000000e+00> : vector<2x32xf32>
    %94 = tpu.matmul %92, %7, %cst_54 {dimension_numbers = #tpu.dot_dimension_numbers<[1], [0], [0], [1], [0, 0, 1, 1], [], []>} : vector<2x32xf32>, vector<32x32xf32>, vector<2x32xf32> -> vector<2x32xf32>
    %95 = arith.addf %93, %94 : vector<2x32xf32>
    %96 = math.tanh %95 : vector<2x32xf32>
    %c22 = arith.constant 22 : index
    %c0_55 = arith.constant 0 : index
    %97 = tpu.strided_load %arg7[%c22, %c0_55] {strides = array<i32: 28, 1>} : memref<56x32xf32, #tpu.memory_space<vmem>>, vector<2x32xf32>
    %cst_56 = arith.constant dense<0.000000e+00> : vector<2x32xf32>
    %98 = tpu.matmul %96, %7, %cst_56 {dimension_numbers = #tpu.dot_dimension_numbers<[1], [0], [0], [1], [0, 0, 1, 1], [], []>} : vector<2x32xf32>, vector<32x32xf32>, vector<2x32xf32> -> vector<2x32xf32>
    %99 = arith.addf %97, %98 : vector<2x32xf32>
    %100 = math.tanh %99 : vector<2x32xf32>
    %c23 = arith.constant 23 : index
    %c0_57 = arith.constant 0 : index
    %101 = tpu.strided_load %arg7[%c23, %c0_57] {strides = array<i32: 28, 1>} : memref<56x32xf32, #tpu.memory_space<vmem>>, vector<2x32xf32>
    %cst_58 = arith.constant dense<0.000000e+00> : vector<2x32xf32>
    %102 = tpu.matmul %100, %7, %cst_58 {dimension_numbers = #tpu.dot_dimension_numbers<[1], [0], [0], [1], [0, 0, 1, 1], [], []>} : vector<2x32xf32>, vector<32x32xf32>, vector<2x32xf32> -> vector<2x32xf32>
    %103 = arith.addf %101, %102 : vector<2x32xf32>
    %104 = math.tanh %103 : vector<2x32xf32>
    %c24 = arith.constant 24 : index
    %c0_59 = arith.constant 0 : index
    %105 = tpu.strided_load %arg7[%c24, %c0_59] {strides = array<i32: 28, 1>} : memref<56x32xf32, #tpu.memory_space<vmem>>, vector<2x32xf32>
    %cst_60 = arith.constant dense<0.000000e+00> : vector<2x32xf32>
    %106 = tpu.matmul %104, %7, %cst_60 {dimension_numbers = #tpu.dot_dimension_numbers<[1], [0], [0], [1], [0, 0, 1, 1], [], []>} : vector<2x32xf32>, vector<32x32xf32>, vector<2x32xf32> -> vector<2x32xf32>
    %107 = arith.addf %105, %106 : vector<2x32xf32>
    %108 = math.tanh %107 : vector<2x32xf32>
    %c25 = arith.constant 25 : index
    %c0_61 = arith.constant 0 : index
    %109 = tpu.strided_load %arg7[%c25, %c0_61] {strides = array<i32: 28, 1>} : memref<56x32xf32, #tpu.memory_space<vmem>>, vector<2x32xf32>
    %cst_62 = arith.constant dense<0.000000e+00> : vector<2x32xf32>
    %110 = tpu.matmul %108, %7, %cst_62 {dimension_numbers = #tpu.dot_dimension_numbers<[1], [0], [0], [1], [0, 0, 1, 1], [], []>} : vector<2x32xf32>, vector<32x32xf32>, vector<2x32xf32> -> vector<2x32xf32>
    %111 = arith.addf %109, %110 : vector<2x32xf32>
    %112 = math.tanh %111 : vector<2x32xf32>
    %c26 = arith.constant 26 : index
    %c0_63 = arith.constant 0 : index
    %113 = tpu.strided_load %arg7[%c26, %c0_63] {strides = array<i32: 28, 1>} : memref<56x32xf32, #tpu.memory_space<vmem>>, vector<2x32xf32>
    %cst_64 = arith.constant dense<0.000000e+00> : vector<2x32xf32>
    %114 = tpu.matmul %112, %7, %cst_64 {dimension_numbers = #tpu.dot_dimension_numbers<[1], [0], [0], [1], [0, 0, 1, 1], [], []>} : vector<2x32xf32>, vector<32x32xf32>, vector<2x32xf32> -> vector<2x32xf32>
    %115 = arith.addf %113, %114 : vector<2x32xf32>
    %116 = math.tanh %115 : vector<2x32xf32>
    %c27 = arith.constant 27 : index
    %c0_65 = arith.constant 0 : index
    %117 = tpu.strided_load %arg7[%c27, %c0_65] {strides = array<i32: 28, 1>} : memref<56x32xf32, #tpu.memory_space<vmem>>, vector<2x32xf32>
    %cst_66 = arith.constant dense<0.000000e+00> : vector<2x32xf32>
    %118 = tpu.matmul %116, %7, %cst_66 {dimension_numbers = #tpu.dot_dimension_numbers<[1], [0], [0], [1], [0, 0, 1, 1], [], []>} : vector<2x32xf32>, vector<32x32xf32>, vector<2x32xf32> -> vector<2x32xf32>
    %119 = arith.addf %117, %118 : vector<2x32xf32>
    %120 = math.tanh %119 : vector<2x32xf32>
    %c0_67 = arith.constant 0 : index
    %c0_68 = arith.constant 0 : index
    %121 = vector.load %arg4[%c0_67, %c0_68] : memref<32x10xf32, #tpu.memory_space<vmem>>, vector<32x10xf32>
    %cst_69 = arith.constant dense<0.000000e+00> : vector<2x10xf32>
    %122 = tpu.matmul %120, %121, %cst_69 {dimension_numbers = #tpu.dot_dimension_numbers<[1], [0], [0], [1], [0, 0, 1, 1], [], []>} : vector<2x32xf32>, vector<32x10xf32>, vector<2x10xf32> -> vector<2x10xf32>
    %c0_70 = arith.constant 0 : index
    %c0_71 = arith.constant 0 : index
    %123 = vector.load %arg5[%c0_70, %c0_71] : memref<1x10xf32, #tpu.memory_space<vmem>>, vector<1x10xf32>
    %124 = vector.broadcast %123 : vector<1x10xf32> to vector<2x10xf32>
    %125 = arith.addf %122, %124 : vector<2x10xf32>
    %c0_72 = arith.constant 0 : index
    %c0_73 = arith.constant 0 : index
    %126 = vector.load %arg6[%c0_72, %c0_73] : memref<2x10xf32, #tpu.memory_space<vmem>>, vector<2x10xf32>
    tpu.vector_store %arg6[%c0_72, %c0_73], %125 {strides = array<i32>} : memref<2x10xf32, #tpu.memory_space<vmem>>, vector<2x10xf32>,
    return
  }
}

</mosaic_0001>

<llo_original>
// kernel: rnn_forward.1
$region0: #{rnn_forward.1}
  #allocation0 [shape = 'u32[]', space=smem, size = 0x4, offset = 0x4, fixed_abs, tag = 'smem constant byte address 0x4 - core index']
  #allocation1 [shape = 'u32[144,128]{1,0:T(1,128)}', space=vmem, size = 0x12000, scoped, tag = 'internal scratch']
  #allocation2 [shape = 'f32[56,32]{1,0:T(8,128)}', space=vmem, size = 0x7000, scoped, tag = 'scratch operand']
  %s0 = inlined_call_operand.vmem [shape: f32[56,28], index: 0, kind: input, shape index: {}]
  %s1 = inlined_call_operand.vmem [shape: f32[28,32], index: 1, kind: input, shape index: {}]
  %s2 = inlined_call_operand.vmem [shape: f32[32,32], index: 2, kind: input, shape index: {}]
  %s3 = inlined_call_operand.vmem [shape: f32[1,32], index: 3, kind: input, shape index: {}]
  %s4 = inlined_call_operand.vmem [shape: f32[32,10], index: 4, kind: input, shape index: {}]
  %s5 = inlined_call_operand.vmem [shape: f32[1,10], index: 5, kind: input, shape index: {}]
  %s6 = inlined_call_operand.hbm [shape: f32[2,10], index: 6, kind: output, shape index: {}]
  %s7 = sld [smem:[#allocation0]]
  $region34: #{rnn_forward.1} parent=0
    _
  %s9 = ssub.s32 1, %s7
  %s10 = scalar_select 0, %s9, %s7
  $region1: #{rnn_forward.1} parent=0
    #allocation3 [shape = 'u8[1024]{0}', space=vmem, size = 0x400, scoped, tag = 'output window, operand 0, single buffered']
    #allocation4 [shape = 's32[1]{0}', space=sflag, size = 0x4, scoped, tag = 'scoped memory for rnn_forward.1']
    %11 = vsyncpa [#allocation4], 0
    // Predicated region
    $region2: #{rnn_forward.1} parent=1 // pred_check
      _
    $region3: #{rnn_forward.1} parent=1 // pred_check_branch
      %13 = sbr.rel (0) target = $region5
    $region4: #{rnn_forward.1} parent=1 // pred_region
      _
    $region5: #{rnn_forward.1} parent=1 // pred_fallthru
      _
    // Predicated region
    $region6: #{rnn_forward.1} parent=1 // pred_check
      _
    $region7: #{rnn_forward.1} parent=1 // pred_check_branch
      %15 = sbr.rel (0) target = $region9
    $region8: #{rnn_forward.1} parent=1 // pred_region
      _
    $region9: #{rnn_forward.1} parent=1 // pred_fallthru
      _
    // Predicated region
    $region10: #{rnn_forward.1} parent=1 // pred_check
      _
    $region11: #{rnn_forward.1} parent=1 // pred_check_branch
      %17 = sbr.rel (0) target = $region13
    $region12: #{rnn_forward.1} parent=1 // pred_region
      _
    $region13: #{rnn_forward.1} parent=1 // pred_fallthru
      _
    // Predicated region
    $region14: #{rnn_forward.1} parent=1 // pred_check
      _
    $region15: #{rnn_forward.1} parent=1 // pred_check_branch
      %19 = sbr.rel (0) target = $region17
    $region16: #{rnn_forward.1} parent=1 // pred_region
      _
    $region17: #{rnn_forward.1} parent=1 // pred_fallthru
      _
    // Predicated region
    $region18: #{rnn_forward.1} parent=1 // pred_check
      _
    $region19: #{rnn_forward.1} parent=1 // pred_check_branch
      %21 = sbr.rel (0) target = $region21
    $region20: #{rnn_forward.1} parent=1 // pred_region
      _
    $region21: #{rnn_forward.1} parent=1 // pred_fallthru
      _
    // Predicated region
    $region22: #{rnn_forward.1} parent=1 // pred_check
      _
    $region23: #{rnn_forward.1} parent=1 // pred_check_branch
      %23 = sbr.rel (0) target = $region25
    $region24: #{rnn_forward.1} parent=1 // pred_region
      _
    $region25: #{rnn_forward.1} parent=1 // pred_fallthru
      _
    %v24 = vld [vmem:[%s0] sm:$0xff]
    %v25 = vld [vmem:[%s0 + $0x8] sm:$0xff]
    %v26 = vld [vmem:[%s0 + $0x10] sm:$0xff]
    %v27 = vld [vmem:[%s0 + $0x18] sm:$0xff]
    %v28 = vld [vmem:[%s0 + $0x20] sm:$0xff]
    %v29 = vld [vmem:[%s0 + $0x28] sm:$0xff]
    %v30 = vld [vmem:[%s0 + $0x30] sm:$0xff]
    %v31 = vld [vmem:[%s1] sm:$0xff]
    %v32 = vld [vmem:[%s1 + $0x8] sm:$0xff]
    %v33 = vld [vmem:[%s1 + $0x10] sm:$0xff]
    %v34 = vld [vmem:[%s1 + $0x18] sm:$0xf]
    %v35 = vld [vmem:[%s3] sm:$0x1]
    %v37 = vlaneseq
    %v38 = vshrl.u32 %v37, 7
    %v39 = vsub.s32 0, %v38
    %v40 = vrot.slane %v35, %v39
    %vm42 = vcmask 228352
    %v44 = vsel %vm42, %v24, 0
    %v47 = vsel %vm42, %v25, 0
    %v50 = vsel %vm42, %v26, 0
    %v53 = vsel %vm42, %v27, 0
    %v56 = vsel %vm42, %v28, 0
    %v59 = vsel %vm42, %v29, 0
    %v62 = vsel %vm42, %v30, 0
    %vm64 = vcmask 1043456
    %v66 = vsel %vm64, %v34, 0
    %68 = vmatprep.subr.mxu0 0.0
    %69 = vmatpush1.msra.mxu0 %v31
    %70 = vmatprep.subr.mxu0 0.0
    %71 = vmatpush1.msra.mxu0 %v32
    %72 = vmatprep.subr.mxu0 0.0
    %73 = vmatpush1.msra.mxu0 %v33
    %74 = vmatprep.subr.mxu0 0.0
    %75 = vmatpush1.msra.mxu0 %v66
    %76 = vmatprep.subr.mxu0 0.0
    %77 = vmatpush1.msra.mxu0 0.0
    %78 = vmatprep.subr.mxu0 0.0
    %79 = vmatpush1.msra.mxu0 0.0
    %80 = vmatprep.subr.mxu0 0.0
    %81 = vmatpush1.msra.mxu0 0.0
    %82 = vmatprep.subr.mxu0 0.0
    %83 = vmatpush1.msra.mxu0 0.0
    %84 = vmatprep.subr.mxu0 0.0
    %85 = vmatpush1.msra.mxu0 0.0
    %86 = vmatprep.subr.mxu0 0.0
    %87 = vmatpush1.msra.mxu0 0.0
    %88 = vmatprep.subr.mxu0 0.0
    %89 = vmatpush1.msra.mxu0 0.0
    %90 = vmatprep.subr.mxu0 0.0
    %91 = vmatpush1.msra.mxu0 0.0
    %92 = vmatprep.subr.mxu0 0.0
    %93 = vmatpush1.msra.mxu0 0.0
    %94 = vmatprep.subr.mxu0 0.0
    %95 = vmatpush1.msra.mxu0 0.0
    %96 = vmatprep.subr.mxu0 0.0
    %97 = vmatpush1.msra.mxu0 0.0
    %98 = vmatprep.subr.mxu0 0.0
    %99 = vmatpush1.msra.mxu0 0.0
    %100 = vmatprep.subr.mxu0 0.0
    %101 = vmatpush1.msra.mxu0 0.0
    %102 = vmatprep.subr.mxu0 0.0
    %103 = vmatpush1.msra.mxu0 0.0
    %104 = vmatprep.subr.mxu0 0.0
    %105 = vmatpush1.msra.mxu0 0.0
    %106 = vmatprep.subr.mxu0 0.0
    %107 = vmatpush1.msra.mxu0 0.0
    %108 = vmatprep.subr.mxu0 0.0
    %109 = vmatpush1.msra.mxu0 0.0
    %110 = vmatprep.subr.mxu0 0.0
    %111 = vmatpush1.msra.mxu0 0.0
    %112 = vmatprep.subr.mxu0 0.0
    %113 = vmatpush1.msra.mxu0 0.0
    %114 = vmatprep.subr.mxu0 0.0
    %115 = vmatpush1.msra.mxu0 0.0
    %116 = vmatprep.subr.mxu0 0.0
    %117 = vmatpush1.msra.mxu0 0.0
    %118 = vmatprep.subr.mxu0 0.0
    %119 = vmatpush1.msra.mxu0 0.0
    %120 = vmatprep.subr.mxu0 0.0
    %121 = vmatpush1.msra.mxu0 0.0
    %122 = vmatprep.subr.mxu0 0.0
    %123 = vmatpush1.msra.mxu0 0.0
    %124 = vmatprep.subr.mxu0 0.0
    %125 = vmatpush1.msra.mxu0 0.0
    %126 = vmatprep.subr.mxu0 0.0
    %127 = vmatpush1.msra.mxu0 0.0
    %128 = vmatprep.subr.mxu0 0.0
    %129 = vmatpush1.msra.mxu0 0.0
    %130 = vmatprep.subr.mxu0 0.0
    %131 = vmatpush1.msra.mxu0 0.0
    %132 = vmatprep.mubr.f32.mxu0 0.0
    %133 = vmatmul.mubr.f32.gmra.mrb[0].mxu0 %v44
    %v134 = vpop.f32.mrb[0].mxu0
    %v135 = vadd.f32 %v40, %v134
    %v136 = vpop.f32.mrb[0].mxu0
    %137 = vmatprep.mubr.f32.mxu0 0.0
    %138 = vmatmul.mubr.f32.gmra.mrb[0].mxu0 %v47
    %v139 = vpop.f32.mrb[0].mxu0
    %v140 = vadd.f32 %v40, %v139
    %v141 = vpop.f32.mrb[0].mxu0
    %142 = vmatprep.mubr.f32.mxu0 0.0
    %143 = vmatmul.mubr.f32.gmra.mrb[0].mxu0 %v50
    %v144 = vpop.f32.mrb[0].mxu0
    %v145 = vadd.f32 %v40, %v144
    %v146 = vpop.f32.mrb[0].mxu0
    %147 = vmatprep.mubr.f32.mxu0 0.0
    %148 = vmatmul.mubr.f32.gmra.mrb[0].mxu0 %v53
    %v149 = vpop.f32.mrb[0].mxu0
    %v150 = vadd.f32 %v40, %v149
    %v151 = vpop.f32.mrb[0].mxu0
    %152 = vmatprep.mubr.f32.mxu0 0.0
    %153 = vmatmul.mubr.f32.gmra.mrb[0].mxu0 %v56
    %v154 = vpop.f32.mrb[0].mxu0
    %v155 = vadd.f32 %v40, %v154
    %v156 = vpop.f32.mrb[0].mxu0
    %157 = vmatprep.mubr.f32.mxu0 0.0
    %158 = vmatmul.mubr.f32.gmra.mrb[0].mxu0 %v59
    %v159 = vpop.f32.mrb[0].mxu0
    %v160 = vadd.f32 %v40, %v159
    %v161 = vpop.f32.mrb[0].mxu0
    %162 = vmatprep.mubr.f32.mxu0 0.0
    %163 = vmatmul.mubr.f32.gmra.mrb[0].mxu0 %v62
    %v164 = vpop.f32.mrb[0].mxu0
    %v165 = vadd.f32 %v40, %v164
    %v166 = vpop.f32.mrb[0].mxu0
    %167 = vdwg.mxu0
    %vm168 = vcmask 261120
    %169 = vst.msk [vmem:[#allocation2] sm:$0xff] %vm168, %v135
    %170 = vst.msk [vmem:[#allocation2 + $0x8] sm:$0xff] %vm168, %v140
    %171 = vst.msk [vmem:[#allocation2 + $0x10] sm:$0xff] %vm168, %v145
    %172 = vst.msk [vmem:[#allocation2 + $0x18] sm:$0xff] %vm168, %v150
    %173 = vst.msk [vmem:[#allocation2 + $0x20] sm:$0xff] %vm168, %v155
    %174 = vst.msk [vmem:[#allocation2 + $0x28] sm:$0xff] %vm168, %v160
    %175 = vst.msk [vmem:[#allocation2 + $0x30] sm:$0xff] %vm168, %v165
    %v176 = vld [vmem:[%s2] sm:$0xff]
    %v177 = vld [vmem:[%s2 + $0x8] sm:$0xff]
    %v178 = vld [vmem:[%s2 + $0x10] sm:$0xff]
    %v179 = vld [vmem:[%s2 + $0x18] sm:$0xff]
    %v180 = vld [vmem:[#allocation2] ss:$28 sm:$0x3]
    %v182 = vsel %vm168, 0.0, 0
    %184 = vmatprep.subr.mxu0 0.0
    %185 = vmatpush1.msra.mxu0 %v176
    %186 = vmatprep.subr.mxu0 0.0
    %187 = vmatpush1.msra.mxu0 %v177
    %188 = vmatprep.subr.mxu0 0.0
    %189 = vmatpush1.msra.mxu0 %v178
    %190 = vmatprep.subr.mxu0 0.0
    %191 = vmatpush1.msra.mxu0 %v179
    %192 = vmatprep.subr.mxu0 0.0
    %193 = vmatpush1.msra.mxu0 0.0
    %194 = vmatprep.subr.mxu0 0.0
    %195 = vmatpush1.msra.mxu0 0.0
    %196 = vmatprep.subr.mxu0 0.0
    %197 = vmatpush1.msra.mxu0 0.0
    %198 = vmatprep.subr.mxu0 0.0
    %199 = vmatpush1.msra.mxu0 0.0
    %200 = vmatprep.subr.mxu0 0.0
    %201 = vmatpush1.msra.mxu0 0.0
    %202 = vmatprep.subr.mxu0 0.0
    %203 = vmatpush1.msra.mxu0 0.0
    %204 = vmatprep.subr.mxu0 0.0
    %205 = vmatpush1.msra.mxu0 0.0
    %206 = vmatprep.subr.mxu0 0.0
    %207 = vmatpush1.msra.mxu0 0.0
    %208 = vmatprep.subr.mxu0 0.0
    %209 = vmatpush1.msra.mxu0 0.0
    %210 = vmatprep.subr.mxu0 0.0
    %211 = vmatpush1.msra.mxu0 0.0
    %212 = vmatprep.subr.mxu0 0.0
    %213 = vmatpush1.msra.mxu0 0.0
    %214 = vmatprep.subr.mxu0 0.0
    %215 = vmatpush1.msra.mxu0 0.0
    %216 = vmatprep.subr.mxu0 0.0
    %217 = vmatpush1.msra.mxu0 0.0
    %218 = vmatprep.subr.mxu0 0.0
    %219 = vmatpush1.msra.mxu0 0.0
    %220 = vmatprep.subr.mxu0 0.0
    %221 = vmatpush1.msra.mxu0 0.0
    %222 = vmatprep.subr.mxu0 0.0
    %223 = vmatpush1.msra.mxu0 0.0
    %224 = vmatprep.subr.mxu0 0.0
    %225 = vmatpush1.msra.mxu0 0.0
    %226 = vmatprep.subr.mxu0 0.0
    %227 = vmatpush1.msra.mxu0 0.0
    %228 = vmatprep.subr.mxu0 0.0
    %229 = vmatpush1.msra.mxu0 0.0
    %230 = vmatprep.subr.mxu0 0.0
    %231 = vmatpush1.msra.mxu0 0.0
    %232 = vmatprep.subr.mxu0 0.0
    %233 = vmatpush1.msra.mxu0 0.0
    %234 = vmatprep.subr.mxu0 0.0
    %235 = vmatpush1.msra.mxu0 0.0
    %236 = vmatprep.subr.mxu0 0.0
    %237 = vmatpush1.msra.mxu0 0.0
    %238 = vmatprep.subr.mxu0 0.0
    %239 = vmatpush1.msra.mxu0 0.0
    %240 = vmatprep.subr.mxu0 0.0
    %241 = vmatpush1.msra.mxu0 0.0
    %242 = vmatprep.subr.mxu0 0.0
    %243 = vmatpush1.msra.mxu0 0.0
    %244 = vmatprep.subr.mxu0 0.0
    %245 = vmatpush1.msra.mxu0 0.0
    %246 = vmatprep.subr.mxu0 0.0
    %247 = vmatpush1.msra.mxu0 0.0
    %248 = vmatprep.mubr.f32.mxu0 0.0
    %249 = vmatmul.mubr.f32.gmra.mrb[0].mxu0 %v182
    %v250 = vpop.f32.mrb[0].mxu0
    %v251 = vadd.f32 0.0, %v250
    %v252 = vpop.f32.mrb[0].mxu0
    %253 = vdwg.mxu0
    %v254 = vadd.f32 %v180, %v251
    %v255 = vtanh.pop %v254
    %s256 = scalar_lea.vmem [#allocation2], 1
    %v257 = vld [vmem:[%s256] ss:$28 sm:$0x3]
    %v259 = vsel %vm168, %v255, 0
    %261 = vmatprep.subr.mxu0 0.0
    %262 = vmatpush1.msra.mxu0 %v176
    %263 = vmatprep.subr.mxu0 0.0
    %264 = vmatpush1.msra.mxu0 %v177
    %265 = vmatprep.subr.mxu0 0.0
    %266 = vmatpush1.msra.mxu0 %v178
    %267 = vmatprep.subr.mxu0 0.0
    %268 = vmatpush1.msra.mxu0 %v179
    %269 = vmatprep.subr.mxu0 0.0
    %270 = vmatpush1.msra.mxu0 0.0
    %271 = vmatprep.subr.mxu0 0.0
    %272 = vmatpush1.msra.mxu0 0.0
    %273 = vmatprep.subr.mxu0 0.0
    %274 = vmatpush1.msra.mxu0 0.0
    %275 = vmatprep.subr.mxu0 0.0
    %276 = vmatpush1.msra.mxu0 0.0
    %277 = vmatprep.subr.mxu0 0.0
    %278 = vmatpush1.msra.mxu0 0.0
    %279 = vmatprep.subr.mxu0 0.0
    %280 = vmatpush1.msra.mxu0 0.0
    %281 = vmatprep.subr.mxu0 0.0
    %282 = vmatpush1.msra.mxu0 0.0
    %283 = vmatprep.subr.mxu0 0.0
    %284 = vmatpush1.msra.mxu0 0.0
    %285 = vmatprep.subr.mxu0 0.0
    %286 = vmatpush1.msra.mxu0 0.0
    %287 = vmatprep.subr.mxu0 0.0
    %288 = vmatpush1.msra.mxu0 0.0
    %289 = vmatprep.subr.mxu0 0.0
    %290 = vmatpush1.msra.mxu0 0.0
    %291 = vmatprep.subr.mxu0 0.0
    %292 = vmatpush1.msra.mxu0 0.0
    %293 = vmatprep.subr.mxu0 0.0
    %294 = vmatpush1.msra.mxu0 0.0
    %295 = vmatprep.subr.mxu0 0.0
    %296 = vmatpush1.msra.mxu0 0.0
    %297 = vmatprep.subr.mxu0 0.0
    %298 = vmatpush1.msra.mxu0 0.0
    %299 = vmatprep.subr.mxu0 0.0
    %300 = vmatpush1.msra.mxu0 0.0
    %301 = vmatprep.subr.mxu0 0.0
    %302 = vmatpush1.msra.mxu0 0.0
    %303 = vmatprep.subr.mxu0 0.0
    %304 = vmatpush1.msra.mxu0 0.0
    %305 = vmatprep.subr.mxu0 0.0
    %306 = vmatpush1.msra.mxu0 0.0
    %307 = vmatprep.subr.mxu0 0.0
    %308 = vmatpush1.msra.mxu0 0.0
    %309 = vmatprep.subr.mxu0 0.0
    %310 = vmatpush1.msra.mxu0 0.0
    %311 = vmatprep.subr.mxu0 0.0
    %312 = vmatpush1.msra.mxu0 0.0
    %313 = vmatprep.subr.mxu0 0.0
    %314 = vmatpush1.msra.mxu0 0.0
    %315 = vmatprep.subr.mxu0 0.0
    %316 = vmatpush1.msra.mxu0 0.0
    %317 = vmatprep.subr.mxu0 0.0
    %318 = vmatpush1.msra.mxu0 0.0
    %319 = vmatprep.subr.mxu0 0.0
    %320 = vmatpush1.msra.mxu0 0.0
    %321 = vmatprep.subr.mxu0 0.0
    %322 = vmatpush1.msra.mxu0 0.0
    %323 = vmatprep.subr.mxu0 0.0
    %324 = vmatpush1.msra.mxu0 0.0
    %325 = vmatprep.mubr.f32.mxu0 0.0
    %326 = vmatmul.mubr.f32.gmra.mrb[0].mxu0 %v259
    %v327 = vpop.f32.mrb[0].mxu0
    %v328 = vadd.f32 0.0, %v327
    %v329 = vpop.f32.mrb[0].mxu0
    %330 = vdwg.mxu0
    %v331 = vadd.f32 %v257, %v328
    %v332 = vtanh.pop %v331
    %s333 = scalar_lea.vmem [#allocation2], 2
    %v334 = vld [vmem:[%s333] ss:$28 sm:$0x3]
    %v336 = vsel %vm168, %v332, 0
    %338 = vmatprep.subr.mxu0 0.0
    %339 = vmatpush1.msra.mxu0 %v176
    %340 = vmatprep.subr.mxu0 0.0
    %341 = vmatpush1.msra.mxu0 %v177
    %342 = vmatprep.subr.mxu0 0.0
    %343 = vmatpush1.msra.mxu0 %v178
    %344 = vmatprep.subr.mxu0 0.0
    %345 = vmatpush1.msra.mxu0 %v179
    %346 = vmatprep.subr.mxu0 0.0
    %347 = vmatpush1.msra.mxu0 0.0
    %348 = vmatprep.subr.mxu0 0.0
    %349 = vmatpush1.msra.mxu0 0.0
    %350 = vmatprep.subr.mxu0 0.0
    %351 = vmatpush1.msra.mxu0 0.0
    %352 = vmatprep.subr.mxu0 0.0
    %353 = vmatpush1.msra.mxu0 0.0
    %354 = vmatprep.subr.mxu0 0.0
    %355 = vmatpush1.msra.mxu0 0.0
    %356 = vmatprep.subr.mxu0 0.0
    %357 = vmatpush1.msra.mxu0 0.0
    %358 = vmatprep.subr.mxu0 0.0
    %359 = vmatpush1.msra.mxu0 0.0
    %360 = vmatprep.subr.mxu0 0.0
    %361 = vmatpush1.msra.mxu0 0.0
    %362 = vmatprep.subr.mxu0 0.0
    %363 = vmatpush1.msra.mxu0 0.0
    %364 = vmatprep.subr.mxu0 0.0
    %365 = vmatpush1.msra.mxu0 0.0
    %366 = vmatprep.subr.mxu0 0.0
    %367 = vmatpush1.msra.mxu0 0.0
    %368 = vmatprep.subr.mxu0 0.0
    %369 = vmatpush1.msra.mxu0 0.0
    %370 = vmatprep.subr.mxu0 0.0
    %371 = vmatpush1.msra.mxu0 0.0
    %372 = vmatprep.subr.mxu0 0.0
    %373 = vmatpush1.msra.mxu0 0.0
    %374 = vmatprep.subr.mxu0 0.0
    %375 = vmatpush1.msra.mxu0 0.0
    %376 = vmatprep.subr.mxu0 0.0
    %377 = vmatpush1.msra.mxu0 0.0
    %378 = vmatprep.subr.mxu0 0.0
    %379 = vmatpush1.msra.mxu0 0.0
    %380 = vmatprep.subr.mxu0 0.0
    %381 = vmatpush1.msra.mxu0 0.0
    %382 = vmatprep.subr.mxu0 0.0
    %383 = vmatpush1.msra.mxu0 0.0
    %384 = vmatprep.subr.mxu0 0.0
    %385 = vmatpush1.msra.mxu0 0.0
    %386 = vmatprep.subr.mxu0 0.0
    %387 = vmatpush1.msra.mxu0 0.0
    %388 = vmatprep.subr.mxu0 0.0
    %389 = vmatpush1.msra.mxu0 0.0
    %390 = vmatprep.subr.mxu0 0.0
    %391 = vmatpush1.msra.mxu0 0.0
    %392 = vmatprep.subr.mxu0 0.0
    %393 = vmatpush1.msra.mxu0 0.0
    %394 = vmatprep.subr.mxu0 0.0
    %395 = vmatpush1.msra.mxu0 0.0
    %396 = vmatprep.subr.mxu0 0.0
    %397 = vmatpush1.msra.mxu0 0.0
    %398 = vmatprep.subr.mxu0 0.0
    %399 = vmatpush1.msra.mxu0 0.0
    %400 = vmatprep.subr.mxu0 0.0
    %401 = vmatpush1.msra.mxu0 0.0
    %402 = vmatprep.mubr.f32.mxu0 0.0
    %403 = vmatmul.mubr.f32.gmra.mrb[0].mxu0 %v336
    %v404 = vpop.f32.mrb[0].mxu0
    %v405 = vadd.f32 0.0, %v404
    %v406 = vpop.f32.mrb[0].mxu0
    %407 = vdwg.mxu0
    %v408 = vadd.f32 %v334, %v405
    %v409 = vtanh.pop %v408
    %s410 = scalar_lea.vmem [#allocation2], 3
    %v411 = vld [vmem:[%s410] ss:$28 sm:$0x3]
    %v413 = vsel %vm168, %v409, 0
    %415 = vmatprep.subr.mxu0 0.0
    %416 = vmatpush1.msra.mxu0 %v176
    %417 = vmatprep.subr.mxu0 0.0
    %418 = vmatpush1.msra.mxu0 %v177
    %419 = vmatprep.subr.mxu0 0.0
    %420 = vmatpush1.msra.mxu0 %v178
    %421 = vmatprep.subr.mxu0 0.0
    %422 = vmatpush1.msra.mxu0 %v179
    %423 = vmatprep.subr.mxu0 0.0
    %424 = vmatpush1.msra.mxu0 0.0
    %425 = vmatprep.subr.mxu0 0.0
    %426 = vmatpush1.msra.mxu0 0.0
    %427 = vmatprep.subr.mxu0 0.0
    %428 = vmatpush1.msra.mxu0 0.0
    %429 = vmatprep.subr.mxu0 0.0
    %430 = vmatpush1.msra.mxu0 0.0
    %431 = vmatprep.subr.mxu0 0.0
    %432 = vmatpush1.msra.mxu0 0.0
    %433 = vmatprep.subr.mxu0 0.0
    %434 = vmatpush1.msra.mxu0 0.0
    %435 = vmatprep.subr.mxu0 0.0
    %436 = vmatpush1.msra.mxu0 0.0
    %437 = vmatprep.subr.mxu0 0.0
    %438 = vmatpush1.msra.mxu0 0.0
    %439 = vmatprep.subr.mxu0 0.0
    %440 = vmatpush1.msra.mxu0 0.0
    %441 = vmatprep.subr.mxu0 0.0
    %442 = vmatpush1.msra.mxu0 0.0
    %443 = vmatprep.subr.mxu0 0.0
    %444 = vmatpush1.msra.mxu0 0.0
    %445 = vmatprep.subr.mxu0 0.0
    %446 = vmatpush1.msra.mxu0 0.0
    %447 = vmatprep.subr.mxu0 0.0
    %448 = vmatpush1.msra.mxu0 0.0
    %449 = vmatprep.subr.mxu0 0.0
    %450 = vmatpush1.msra.mxu0 0.0
    %451 = vmatprep.subr.mxu0 0.0
    %452 = vmatpush1.msra.mxu0 0.0
    %453 = vmatprep.subr.mxu0 0.0
    %454 = vmatpush1.msra.mxu0 0.0
    %455 = vmatprep.subr.mxu0 0.0
    %456 = vmatpush1.msra.mxu0 0.0
    %457 = vmatprep.subr.mxu0 0.0
    %458 = vmatpush1.msra.mxu0 0.0
    %459 = vmatprep.subr.mxu0 0.0
    %460 = vmatpush1.msra.mxu0 0.0
    %461 = vmatprep.subr.mxu0 0.0
    %462 = vmatpush1.msra.mxu0 0.0
    %463 = vmatprep.subr.mxu0 0.0
    %464 = vmatpush1.msra.mxu0 0.0
    %465 = vmatprep.subr.mxu0 0.0
    %466 = vmatpush1.msra.mxu0 0.0
    %467 = vmatprep.subr.mxu0 0.0
    %468 = vmatpush1.msra.mxu0 0.0
    %469 = vmatprep.subr.mxu0 0.0
    %470 = vmatpush1.msra.mxu0 0.0
    %471 = vmatprep.subr.mxu0 0.0
    %472 = vmatpush1.msra.mxu0 0.0
    %473 = vmatprep.subr.mxu0 0.0
    %474 = vmatpush1.msra.mxu0 0.0
    %475 = vmatprep.subr.mxu0 0.0
    %476 = vmatpush1.msra.mxu0 0.0
    %477 = vmatprep.subr.mxu0 0.0
    %478 = vmatpush1.msra.mxu0 0.0
    %479 = vmatprep.mubr.f32.mxu0 0.0
    %480 = vmatmul.mubr.f32.gmra.mrb[0].mxu0 %v413
    %v481 = vpop.f32.mrb[0].mxu0
    %v482 = vadd.f32 0.0, %v481
    %v483 = vpop.f32.mrb[0].mxu0
    %484 = vdwg.mxu0
    %v485 = vadd.f32 %v411, %v482
    %v486 = vtanh.pop %v485
    %s487 = scalar_lea.vmem [#allocation2], 4
    %v488 = vld [vmem:[%s487] ss:$28 sm:$0x3]
    %v490 = vsel %vm168, %v486, 0
    %492 = vmatprep.subr.mxu0 0.0
    %493 = vmatpush1.msra.mxu0 %v176
    %494 = vmatprep.subr.mxu0 0.0
    %495 = vmatpush1.msra.mxu0 %v177
    %496 = vmatprep.subr.mxu0 0.0
    %497 = vmatpush1.msra.mxu0 %v178
    %498 = vmatprep.subr.mxu0 0.0
    %499 = vmatpush1.msra.mxu0 %v179
    %500 = vmatprep.subr.mxu0 0.0
    %501 = vmatpush1.msra.mxu0 0.0
    %502 = vmatprep.subr.mxu0 0.0
    %503 = vmatpush1.msra.mxu0 0.0
    %504 = vmatprep.subr.mxu0 0.0
    %505 = vmatpush1.msra.mxu0 0.0
    %506 = vmatprep.subr.mxu0 0.0
    %507 = vmatpush1.msra.mxu0 0.0
    %508 = vmatprep.subr.mxu0 0.0
    %509 = vmatpush1.msra.mxu0 0.0
    %510 = vmatprep.subr.mxu0 0.0
    %511 = vmatpush1.msra.mxu0 0.0
    %512 = vmatprep.subr.mxu0 0.0
    %513 = vmatpush1.msra.mxu0 0.0
    %514 = vmatprep.subr.mxu0 0.0
    %515 = vmatpush1.msra.mxu0 0.0
    %516 = vmatprep.subr.mxu0 0.0
    %517 = vmatpush1.msra.mxu0 0.0
    %518 = vmatprep.subr.mxu0 0.0
    %519 = vmatpush1.msra.mxu0 0.0
    %520 = vmatprep.subr.mxu0 0.0
    %521 = vmatpush1.msra.mxu0 0.0
    %522 = vmatprep.subr.mxu0 0.0
    %523 = vmatpush1.msra.mxu0 0.0
    %524 = vmatprep.subr.mxu0 0.0
    %525 = vmatpush1.msra.mxu0 0.0
    %526 = vmatprep.subr.mxu0 0.0
    %527 = vmatpush1.msra.mxu0 0.0
    %528 = vmatprep.subr.mxu0 0.0
    %529 = vmatpush1.msra.mxu0 0.0
    %530 = vmatprep.subr.mxu0 0.0
    %531 = vmatpush1.msra.mxu0 0.0
    %532 = vmatprep.subr.mxu0 0.0
    %533 = vmatpush1.msra.mxu0 0.0
    %534 = vmatprep.subr.mxu0 0.0
    %535 = vmatpush1.msra.mxu0 0.0
    %536 = vmatprep.subr.mxu0 0.0
    %537 = vmatpush1.msra.mxu0 0.0
    %538 = vmatprep.subr.mxu0 0.0
    %539 = vmatpush1.msra.mxu0 0.0
    %540 = vmatprep.subr.mxu0 0.0
    %541 = vmatpush1.msra.mxu0 0.0
    %542 = vmatprep.subr.mxu0 0.0
    %543 = vmatpush1.msra.mxu0 0.0
    %544 = vmatprep.subr.mxu0 0.0
    %545 = vmatpush1.msra.mxu0 0.0
    %546 = vmatprep.subr.mxu0 0.0
    %547 = vmatpush1.msra.mxu0 0.0
    %548 = vmatprep.subr.mxu0 0.0
    %549 = vmatpush1.msra.mxu0 0.0
    %550 = vmatprep.subr.mxu0 0.0
    %551 = vmatpush1.msra.mxu0 0.0
    %552 = vmatprep.subr.mxu0 0.0
    %553 = vmatpush1.msra.mxu0 0.0
    %554 = vmatprep.subr.mxu0 0.0
    %555 = vmatpush1.msra.mxu0 0.0
    %556 = vmatprep.mubr.f32.mxu0 0.0
    %557 = vmatmul.mubr.f32.gmra.mrb[0].mxu0 %v490
    %v558 = vpop.f32.mrb[0].mxu0
    %v559 = vadd.f32 0.0, %v558
    %v560 = vpop.f32.mrb[0].mxu0
    %561 = vdwg.mxu0
    %v562 = vadd.f32 %v488, %v559
    %v563 = vtanh.pop %v562
    %s564 = scalar_lea.vmem [#allocation2], 5
    %v565 = vld [vmem:[%s564] ss:$28 sm:$0x3]
    %v567 = vsel %vm168, %v563, 0
    %569 = vmatprep.subr.mxu0 0.0
    %570 = vmatpush1.msra.mxu0 %v176
    %571 = vmatprep.subr.mxu0 0.0
    %572 = vmatpush1.msra.mxu0 %v177
    %573 = vmatprep.subr.mxu0 0.0
    %574 = vmatpush1.msra.mxu0 %v178
    %575 = vmatprep.subr.mxu0 0.0
    %576 = vmatpush1.msra.mxu0 %v179
    %577 = vmatprep.subr.mxu0 0.0
    %578 = vmatpush1.msra.mxu0 0.0
    %579 = vmatprep.subr.mxu0 0.0
    %580 = vmatpush1.msra.mxu0 0.0
    %581 = vmatprep.subr.mxu0 0.0
    %582 = vmatpush1.msra.mxu0 0.0
    %583 = vmatprep.subr.mxu0 0.0
    %584 = vmatpush1.msra.mxu0 0.0
    %585 = vmatprep.subr.mxu0 0.0
    %586 = vmatpush1.msra.mxu0 0.0
    %587 = vmatprep.subr.mxu0 0.0
    %588 = vmatpush1.msra.mxu0 0.0
    %589 = vmatprep.subr.mxu0 0.0
    %590 = vmatpush1.msra.mxu0 0.0
    %591 = vmatprep.subr.mxu0 0.0
    %592 = vmatpush1.msra.mxu0 0.0
    %593 = vmatprep.subr.mxu0 0.0
    %594 = vmatpush1.msra.mxu0 0.0
    %595 = vmatprep.subr.mxu0 0.0
    %596 = vmatpush1.msra.mxu0 0.0
    %597 = vmatprep.subr.mxu0 0.0
    %598 = vmatpush1.msra.mxu0 0.0
    %599 = vmatprep.subr.mxu0 0.0
    %600 = vmatpush1.msra.mxu0 0.0
    %601 = vmatprep.subr.mxu0 0.0
    %602 = vmatpush1.msra.mxu0 0.0
    %603 = vmatprep.subr.mxu0 0.0
    %604 = vmatpush1.msra.mxu0 0.0
    %605 = vmatprep.subr.mxu0 0.0
    %606 = vmatpush1.msra.mxu0 0.0
    %607 = vmatprep.subr.mxu0 0.0
    %608 = vmatpush1.msra.mxu0 0.0
    %609 = vmatprep.subr.mxu0 0.0
    %610 = vmatpush1.msra.mxu0 0.0
    %611 = vmatprep.subr.mxu0 0.0
    %612 = vmatpush1.msra.mxu0 0.0
    %613 = vmatprep.subr.mxu0 0.0
    %614 = vmatpush1.msra.mxu0 0.0
    %615 = vmatprep.subr.mxu0 0.0
    %616 = vmatpush1.msra.mxu0 0.0
    %617 = vmatprep.subr.mxu0 0.0
    %618 = vmatpush1.msra.mxu0 0.0
    %619 = vmatprep.subr.mxu0 0.0
    %620 = vmatpush1.msra.mxu0 0.0
    %621 = vmatprep.subr.mxu0 0.0
    %622 = vmatpush1.msra.mxu0 0.0
    %623 = vmatprep.subr.mxu0 0.0
    %624 = vmatpush1.msra.mxu0 0.0
    %625 = vmatprep.subr.mxu0 0.0
    %626 = vmatpush1.msra.mxu0 0.0
    %627 = vmatprep.subr.mxu0 0.0
    %628 = vmatpush1.msra.mxu0 0.0
    %629 = vmatprep.subr.mxu0 0.0
    %630 = vmatpush1.msra.mxu0 0.0
    %631 = vmatprep.subr.mxu0 0.0
    %632 = vmatpush1.msra.mxu0 0.0
    %633 = vmatprep.mubr.f32.mxu0 0.0
    %634 = vmatmul.mubr.f32.gmra.mrb[0].mxu0 %v567
    %v635 = vpop.f32.mrb[0].mxu0
    %v636 = vadd.f32 0.0, %v635
    %v637 = vpop.f32.mrb[0].mxu0
    %638 = vdwg.mxu0
    %v639 = vadd.f32 %v565, %v636
    %v640 = vtanh.pop %v639
    %s641 = scalar_lea.vmem [#allocation2], 6
    %v642 = vld [vmem:[%s641] ss:$28 sm:$0x3]
    %v644 = vsel %vm168, %v640, 0
    %646 = vmatprep.subr.mxu0 0.0
    %647 = vmatpush1.msra.mxu0 %v176
    %648 = vmatprep.subr.mxu0 0.0
    %649 = vmatpush1.msra.mxu0 %v177
    %650 = vmatprep.subr.mxu0 0.0
    %651 = vmatpush1.msra.mxu0 %v178
    %652 = vmatprep.subr.mxu0 0.0
    %653 = vmatpush1.msra.mxu0 %v179
    %654 = vmatprep.subr.mxu0 0.0
    %655 = vmatpush1.msra.mxu0 0.0
    %656 = vmatprep.subr.mxu0 0.0
    %657 = vmatpush1.msra.mxu0 0.0
    %658 = vmatprep.subr.mxu0 0.0
    %659 = vmatpush1.msra.mxu0 0.0
    %660 = vmatprep.subr.mxu0 0.0
    %661 = vmatpush1.msra.mxu0 0.0
    %662 = vmatprep.subr.mxu0 0.0
    %663 = vmatpush1.msra.mxu0 0.0
    %664 = vmatprep.subr.mxu0 0.0
    %665 = vmatpush1.msra.mxu0 0.0
    %666 = vmatprep.subr.mxu0 0.0
    %667 = vmatpush1.msra.mxu0 0.0
    %668 = vmatprep.subr.mxu0 0.0
    %669 = vmatpush1.msra.mxu0 0.0
    %670 = vmatprep.subr.mxu0 0.0
    %671 = vmatpush1.msra.mxu0 0.0
    %672 = vmatprep.subr.mxu0 0.0
    %673 = vmatpush1.msra.mxu0 0.0
    %674 = vmatprep.subr.mxu0 0.0
    %675 = vmatpush1.msra.mxu0 0.0
    %676 = vmatprep.subr.mxu0 0.0
    %677 = vmatpush1.msra.mxu0 0.0
    %678 = vmatprep.subr.mxu0 0.0
    %679 = vmatpush1.msra.mxu0 0.0
    %680 = vmatprep.subr.mxu0 0.0
    %681 = vmatpush1.msra.mxu0 0.0
    %682 = vmatprep.subr.mxu0 0.0
    %683 = vmatpush1.msra.mxu0 0.0
    %684 = vmatprep.subr.mxu0 0.0
    %685 = vmatpush1.msra.mxu0 0.0
    %686 = vmatprep.subr.mxu0 0.0
    %687 = vmatpush1.msra.mxu0 0.0
    %688 = vmatprep.subr.mxu0 0.0
    %689 = vmatpush1.msra.mxu0 0.0
    %690 = vmatprep.subr.mxu0 0.0
    %691 = vmatpush1.msra.mxu0 0.0
    %692 = vmatprep.subr.mxu0 0.0
    %693 = vmatpush1.msra.mxu0 0.0
    %694 = vmatprep.subr.mxu0 0.0
    %695 = vmatpush1.msra.mxu0 0.0
    %696 = vmatprep.subr.mxu0 0.0
    %697 = vmatpush1.msra.mxu0 0.0
    %698 = vmatprep.subr.mxu0 0.0
    %699 = vmatpush1.msra.mxu0 0.0
    %700 = vmatprep.subr.mxu0 0.0
    %701 = vmatpush1.msra.mxu0 0.0
    %702 = vmatprep.subr.mxu0 0.0
    %703 = vmatpush1.msra.mxu0 0.0
    %704 = vmatprep.subr.mxu0 0.0
    %705 = vmatpush1.msra.mxu0 0.0
    %706 = vmatprep.subr.mxu0 0.0
    %707 = vmatpush1.msra.mxu0 0.0
    %708 = vmatprep.subr.mxu0 0.0
    %709 = vmatpush1.msra.mxu0 0.0
    %710 = vmatprep.mubr.f32.mxu0 0.0
    %711 = vmatmul.mubr.f32.gmra.mrb[0].mxu0 %v644
    %v712 = vpop.f32.mrb[0].mxu0
    %v713 = vadd.f32 0.0, %v712
    %v714 = vpop.f32.mrb[0].mxu0
    %715 = vdwg.mxu0
    %v716 = vadd.f32 %v642, %v713
    %v717 = vtanh.pop %v716
    %s718 = scalar_lea.vmem [#allocation2], 7
    %v719 = vld [vmem:[%s718] ss:$28 sm:$0x3]
    %v721 = vsel %vm168, %v717, 0
    %723 = vmatprep.subr.mxu0 0.0
    %724 = vmatpush1.msra.mxu0 %v176
    %725 = vmatprep.subr.mxu0 0.0
    %726 = vmatpush1.msra.mxu0 %v177
    %727 = vmatprep.subr.mxu0 0.0
    %728 = vmatpush1.msra.mxu0 %v178
    %729 = vmatprep.subr.mxu0 0.0
    %730 = vmatpush1.msra.mxu0 %v179
    %731 = vmatprep.subr.mxu0 0.0
    %732 = vmatpush1.msra.mxu0 0.0
    %733 = vmatprep.subr.mxu0 0.0
    %734 = vmatpush1.msra.mxu0 0.0
    %735 = vmatprep.subr.mxu0 0.0
    %736 = vmatpush1.msra.mxu0 0.0
    %737 = vmatprep.subr.mxu0 0.0
    %738 = vmatpush1.msra.mxu0 0.0
    %739 = vmatprep.subr.mxu0 0.0
    %740 = vmatpush1.msra.mxu0 0.0
    %741 = vmatprep.subr.mxu0 0.0
    %742 = vmatpush1.msra.mxu0 0.0
    %743 = vmatprep.subr.mxu0 0.0
    %744 = vmatpush1.msra.mxu0 0.0
    %745 = vmatprep.subr.mxu0 0.0
    %746 = vmatpush1.msra.mxu0 0.0
    %747 = vmatprep.subr.mxu0 0.0
    %748 = vmatpush1.msra.mxu0 0.0
    %749 = vmatprep.subr.mxu0 0.0
    %750 = vmatpush1.msra.mxu0 0.0
    %751 = vmatprep.subr.mxu0 0.0
    %752 = vmatpush1.msra.mxu0 0.0
    %753 = vmatprep.subr.mxu0 0.0
    %754 = vmatpush1.msra.mxu0 0.0
    %755 = vmatprep.subr.mxu0 0.0
    %756 = vmatpush1.msra.mxu0 0.0
    %757 = vmatprep.subr.mxu0 0.0
    %758 = vmatpush1.msra.mxu0 0.0
    %759 = vmatprep.subr.mxu0 0.0
    %760 = vmatpush1.msra.mxu0 0.0
    %761 = vmatprep.subr.mxu0 0.0
    %762 = vmatpush1.msra.mxu0 0.0
    %763 = vmatprep.subr.mxu0 0.0
    %764 = vmatpush1.msra.mxu0 0.0
    %765 = vmatprep.subr.mxu0 0.0
    %766 = vmatpush1.msra.mxu0 0.0
    %767 = vmatprep.subr.mxu0 0.0
    %768 = vmatpush1.msra.mxu0 0.0
    %769 = vmatprep.subr.mxu0 0.0
    %770 = vmatpush1.msra.mxu0 0.0
    %771 = vmatprep.subr.mxu0 0.0
    %772 = vmatpush1.msra.mxu0 0.0
    %773 = vmatprep.subr.mxu0 0.0
    %774 = vmatpush1.msra.mxu0 0.0
    %775 = vmatprep.subr.mxu0 0.0
    %776 = vmatpush1.msra.mxu0 0.0
    %777 = vmatprep.subr.mxu0 0.0
    %778 = vmatpush1.msra.mxu0 0.0
    %779 = vmatprep.subr.mxu0 0.0
    %780 = vmatpush1.msra.mxu0 0.0
    %781 = vmatprep.subr.mxu0 0.0
    %782 = vmatpush1.msra.mxu0 0.0
    %783 = vmatprep.subr.mxu0 0.0
    %784 = vmatpush1.msra.mxu0 0.0
    %785 = vmatprep.subr.mxu0 0.0
    %786 = vmatpush1.msra.mxu0 0.0
    %787 = vmatprep.mubr.f32.mxu0 0.0
    %788 = vmatmul.mubr.f32.gmra.mrb[0].mxu0 %v721
    %v789 = vpop.f32.mrb[0].mxu0
    %v790 = vadd.f32 0.0, %v789
    %v791 = vpop.f32.mrb[0].mxu0
    %792 = vdwg.mxu0
    %v793 = vadd.f32 %v719, %v790
    %v794 = vtanh.pop %v793
    %s795 = scalar_lea.vmem [#allocation2], 8
    %v796 = vld [vmem:[%s795] ss:$28 sm:$0x3]
    %v798 = vsel %vm168, %v794, 0
    %800 = vmatprep.subr.mxu0 0.0
    %801 = vmatpush1.msra.mxu0 %v176
    %802 = vmatprep.subr.mxu0 0.0
    %803 = vmatpush1.msra.mxu0 %v177
    %804 = vmatprep.subr.mxu0 0.0
    %805 = vmatpush1.msra.mxu0 %v178
    %806 = vmatprep.subr.mxu0 0.0
    %807 = vmatpush1.msra.mxu0 %v179
    %808 = vmatprep.subr.mxu0 0.0
    %809 = vmatpush1.msra.mxu0 0.0
    %810 = vmatprep.subr.mxu0 0.0
    %811 = vmatpush1.msra.mxu0 0.0
    %812 = vmatprep.subr.mxu0 0.0
    %813 = vmatpush1.msra.mxu0 0.0
    %814 = vmatprep.subr.mxu0 0.0
    %815 = vmatpush1.msra.mxu0 0.0
    %816 = vmatprep.subr.mxu0 0.0
    %817 = vmatpush1.msra.mxu0 0.0
    %818 = vmatprep.subr.mxu0 0.0
    %819 = vmatpush1.msra.mxu0 0.0
    %820 = vmatprep.subr.mxu0 0.0
    %821 = vmatpush1.msra.mxu0 0.0
    %822 = vmatprep.subr.mxu0 0.0
    %823 = vmatpush1.msra.mxu0 0.0
    %824 = vmatprep.subr.mxu0 0.0
    %825 = vmatpush1.msra.mxu0 0.0
    %826 = vmatprep.subr.mxu0 0.0
    %827 = vmatpush1.msra.mxu0 0.0
    %828 = vmatprep.subr.mxu0 0.0
    %829 = vmatpush1.msra.mxu0 0.0
    %830 = vmatprep.subr.mxu0 0.0
    %831 = vmatpush1.msra.mxu0 0.0
    %832 = vmatprep.subr.mxu0 0.0
    %833 = vmatpush1.msra.mxu0 0.0
    %834 = vmatprep.subr.mxu0 0.0
    %835 = vmatpush1.msra.mxu0 0.0
    %836 = vmatprep.subr.mxu0 0.0
    %837 = vmatpush1.msra.mxu0 0.0
    %838 = vmatprep.subr.mxu0 0.0
    %839 = vmatpush1.msra.mxu0 0.0
    %840 = vmatprep.subr.mxu0 0.0
    %841 = vmatpush1.msra.mxu0 0.0
    %842 = vmatprep.subr.mxu0 0.0
    %843 = vmatpush1.msra.mxu0 0.0
    %844 = vmatprep.subr.mxu0 0.0
    %845 = vmatpush1.msra.mxu0 0.0
    %846 = vmatprep.subr.mxu0 0.0
    %847 = vmatpush1.msra.mxu0 0.0
    %848 = vmatprep.subr.mxu0 0.0
    %849 = vmatpush1.msra.mxu0 0.0
    %850 = vmatprep.subr.mxu0 0.0
    %851 = vmatpush1.msra.mxu0 0.0
    %852 = vmatprep.subr.mxu0 0.0
    %853 = vmatpush1.msra.mxu0 0.0
    %854 = vmatprep.subr.mxu0 0.0
    %855 = vmatpush1.msra.mxu0 0.0
    %856 = vmatprep.subr.mxu0 0.0
    %857 = vmatpush1.msra.mxu0 0.0
    %858 = vmatprep.subr.mxu0 0.0
    %859 = vmatpush1.msra.mxu0 0.0
    %860 = vmatprep.subr.mxu0 0.0
    %861 = vmatpush1.msra.mxu0 0.0
    %862 = vmatprep.subr.mxu0 0.0
    %863 = vmatpush1.msra.mxu0 0.0
    %864 = vmatprep.mubr.f32.mxu0 0.0
    %865 = vmatmul.mubr.f32.gmra.mrb[0].mxu0 %v798
    %v866 = vpop.f32.mrb[0].mxu0
    %v867 = vadd.f32 0.0, %v866
    %v868 = vpop.f32.mrb[0].mxu0
    %869 = vdwg.mxu0
    %v870 = vadd.f32 %v796, %v867
    %v871 = vtanh.pop %v870
    %s872 = scalar_lea.vmem [#allocation2], 9
    %v873 = vld [vmem:[%s872] ss:$28 sm:$0x3]
    %v875 = vsel %vm168, %v871, 0
    %877 = vmatprep.subr.mxu0 0.0
    %878 = vmatpush1.msra.mxu0 %v176
    %879 = vmatprep.subr.mxu0 0.0
    %880 = vmatpush1.msra.mxu0 %v177
    %881 = vmatprep.subr.mxu0 0.0
    %882 = vmatpush1.msra.mxu0 %v178
    %883 = vmatprep.subr.mxu0 0.0
    %884 = vmatpush1.msra.mxu0 %v179
    %885 = vmatprep.subr.mxu0 0.0
    %886 = vmatpush1.msra.mxu0 0.0
    %887 = vmatprep.subr.mxu0 0.0
    %888 = vmatpush1.msra.mxu0 0.0
    %889 = vmatprep.subr.mxu0 0.0
    %890 = vmatpush1.msra.mxu0 0.0
    %891 = vmatprep.subr.mxu0 0.0
    %892 = vmatpush1.msra.mxu0 0.0
    %893 = vmatprep.subr.mxu0 0.0
    %894 = vmatpush1.msra.mxu0 0.0
    %895 = vmatprep.subr.mxu0 0.0
    %896 = vmatpush1.msra.mxu0 0.0
    %897 = vmatprep.subr.mxu0 0.0
    %898 = vmatpush1.msra.mxu0 0.0
    %899 = vmatprep.subr.mxu0 0.0
    %900 = vmatpush1.msra.mxu0 0.0
    %901 = vmatprep.subr.mxu0 0.0
    %902 = vmatpush1.msra.mxu0 0.0
    %903 = vmatprep.subr.mxu0 0.0
    %904 = vmatpush1.msra.mxu0 0.0
    %905 = vmatprep.subr.mxu0 0.0
    %906 = vmatpush1.msra.mxu0 0.0
    %907 = vmatprep.subr.mxu0 0.0
    %908 = vmatpush1.msra.mxu0 0.0
    %909 = vmatprep.subr.mxu0 0.0
    %910 = vmatpush1.msra.mxu0 0.0
    %911 = vmatprep.subr.mxu0 0.0
    %912 = vmatpush1.msra.mxu0 0.0
    %913 = vmatprep.subr.mxu0 0.0
    %914 = vmatpush1.msra.mxu0 0.0
    %915 = vmatprep.subr.mxu0 0.0
    %916 = vmatpush1.msra.mxu0 0.0
    %917 = vmatprep.subr.mxu0 0.0
    %918 = vmatpush1.msra.mxu0 0.0
    %919 = vmatprep.subr.mxu0 0.0
    %920 = vmatpush1.msra.mxu0 0.0
    %921 = vmatprep.subr.mxu0 0.0
    %922 = vmatpush1.msra.mxu0 0.0
    %923 = vmatprep.subr.mxu0 0.0
    %924 = vmatpush1.msra.mxu0 0.0
    %925 = vmatprep.subr.mxu0 0.0
    %926 = vmatpush1.msra.mxu0 0.0
    %927 = vmatprep.subr.mxu0 0.0
    %928 = vmatpush1.msra.mxu0 0.0
    %929 = vmatprep.subr.mxu0 0.0
    %930 = vmatpush1.msra.mxu0 0.0
    %931 = vmatprep.subr.mxu0 0.0
    %932 = vmatpush1.msra.mxu0 0.0
    %933 = vmatprep.subr.mxu0 0.0
    %934 = vmatpush1.msra.mxu0 0.0
    %935 = vmatprep.subr.mxu0 0.0
    %936 = vmatpush1.msra.mxu0 0.0
    %937 = vmatprep.subr.mxu0 0.0
    %938 = vmatpush1.msra.mxu0 0.0
    %939 = vmatprep.subr.mxu0 0.0
    %940 = vmatpush1.msra.mxu0 0.0
    %941 = vmatprep.mubr.f32.mxu0 0.0
    %942 = vmatmul.mubr.f32.gmra.mrb[0].mxu0 %v875
    %v943 = vpop.f32.mrb[0].mxu0
    %v944 = vadd.f32 0.0, %v943
    %v945 = vpop.f32.mrb[0].mxu0
    %946 = vdwg.mxu0
    %v947 = vadd.f32 %v873, %v944
    %v948 = vtanh.pop %v947
    %s949 = scalar_lea.vmem [#allocation2], 10
    %v950 = vld [vmem:[%s949] ss:$28 sm:$0x3]
    %v952 = vsel %vm168, %v948, 0
    %954 = vmatprep.subr.mxu0 0.0
    %955 = vmatpush1.msra.mxu0 %v176
    %956 = vmatprep.subr.mxu0 0.0
    %957 = vmatpush1.msra.mxu0 %v177
    %958 = vmatprep.subr.mxu0 0.0
    %959 = vmatpush1.msra.mxu0 %v178
    %960 = vmatprep.subr.mxu0 0.0
    %961 = vmatpush1.msra.mxu0 %v179
    %962 = vmatprep.subr.mxu0 0.0
    %963 = vmatpush1.msra.mxu0 0.0
    %964 = vmatprep.subr.mxu0 0.0
    %965 = vmatpush1.msra.mxu0 0.0
    %966 = vmatprep.subr.mxu0 0.0
    %967 = vmatpush1.msra.mxu0 0.0
    %968 = vmatprep.subr.mxu0 0.0
    %969 = vmatpush1.msra.mxu0 0.0
    %970 = vmatprep.subr.mxu0 0.0
    %971 = vmatpush1.msra.mxu0 0.0
    %972 = vmatprep.subr.mxu0 0.0
    %973 = vmatpush1.msra.mxu0 0.0
    %974 = vmatprep.subr.mxu0 0.0
    %975 = vmatpush1.msra.mxu0 0.0
    %976 = vmatprep.subr.mxu0 0.0
    %977 = vmatpush1.msra.mxu0 0.0
    %978 = vmatprep.subr.mxu0 0.0
    %979 = vmatpush1.msra.mxu0 0.0
    %980 = vmatprep.subr.mxu0 0.0
    %981 = vmatpush1.msra.mxu0 0.0
    %982 = vmatprep.subr.mxu0 0.0
    %983 = vmatpush1.msra.mxu0 0.0
    %984 = vmatprep.subr.mxu0 0.0
    %985 = vmatpush1.msra.mxu0 0.0
    %986 = vmatprep.subr.mxu0 0.0
    %987 = vmatpush1.msra.mxu0 0.0
    %988 = vmatprep.subr.mxu0 0.0
    %989 = vmatpush1.msra.mxu0 0.0
    %990 = vmatprep.subr.mxu0 0.0
    %991 = vmatpush1.msra.mxu0 0.0
    %992 = vmatprep.subr.mxu0 0.0
    %993 = vmatpush1.msra.mxu0 0.0
    %994 = vmatprep.subr.mxu0 0.0
    %995 = vmatpush1.msra.mxu0 0.0
    %996 = vmatprep.subr.mxu0 0.0
    %997 = vmatpush1.msra.mxu0 0.0
    %998 = vmatprep.subr.mxu0 0.0
    %999 = vmatpush1.msra.mxu0 0.0
    %1000 = vmatprep.subr.mxu0 0.0
    %1001 = vmatpush1.msra.mxu0 0.0
    %1002 = vmatprep.subr.mxu0 0.0
    %1003 = vmatpush1.msra.mxu0 0.0
    %1004 = vmatprep.subr.mxu0 0.0
    %1005 = vmatpush1.msra.mxu0 0.0
    %1006 = vmatprep.subr.mxu0 0.0
    %1007 = vmatpush1.msra.mxu0 0.0
    %1008 = vmatprep.subr.mxu0 0.0
    %1009 = vmatpush1.msra.mxu0 0.0
    %1010 = vmatprep.subr.mxu0 0.0
    %1011 = vmatpush1.msra.mxu0 0.0
    %1012 = vmatprep.subr.mxu0 0.0
    %1013 = vmatpush1.msra.mxu0 0.0
    %1014 = vmatprep.subr.mxu0 0.0
    %1015 = vmatpush1.msra.mxu0 0.0
    %1016 = vmatprep.subr.mxu0 0.0
    %1017 = vmatpush1.msra.mxu0 0.0
    %1018 = vmatprep.mubr.f32.mxu0 0.0
    %1019 = vmatmul.mubr.f32.gmra.mrb[0].mxu0 %v952
    %v1020 = vpop.f32.mrb[0].mxu0
    %v1021 = vadd.f32 0.0, %v1020
    %v1022 = vpop.f32.mrb[0].mxu0
    %1023 = vdwg.mxu0
    %v1024 = vadd.f32 %v950, %v1021
    %v1025 = vtanh.pop %v1024
    %s1026 = scalar_lea.vmem [#allocation2], 11
    %v1027 = vld [vmem:[%s1026] ss:$28 sm:$0x3]
    %v1029 = vsel %vm168, %v1025, 0
    %1031 = vmatprep.subr.mxu0 0.0
    %1032 = vmatpush1.msra.mxu0 %v176
    %1033 = vmatprep.subr.mxu0 0.0
    %1034 = vmatpush1.msra.mxu0 %v177
    %1035 = vmatprep.subr.mxu0 0.0
    %1036 = vmatpush1.msra.mxu0 %v178
    %1037 = vmatprep.subr.mxu0 0.0
    %1038 = vmatpush1.msra.mxu0 %v179
    %1039 = vmatprep.subr.mxu0 0.0
    %1040 = vmatpush1.msra.mxu0 0.0
    %1041 = vmatprep.subr.mxu0 0.0
    %1042 = vmatpush1.msra.mxu0 0.0
    %1043 = vmatprep.subr.mxu0 0.0
    %1044 = vmatpush1.msra.mxu0 0.0
    %1045 = vmatprep.subr.mxu0 0.0
    %1046 = vmatpush1.msra.mxu0 0.0
    %1047 = vmatprep.subr.mxu0 0.0
    %1048 = vmatpush1.msra.mxu0 0.0
    %1049 = vmatprep.subr.mxu0 0.0
    %1050 = vmatpush1.msra.mxu0 0.0
    %1051 = vmatprep.subr.mxu0 0.0
    %1052 = vmatpush1.msra.mxu0 0.0
    %1053 = vmatprep.subr.mxu0 0.0
    %1054 = vmatpush1.msra.mxu0 0.0
    %1055 = vmatprep.subr.mxu0 0.0
    %1056 = vmatpush1.msra.mxu0 0.0
    %1057 = vmatprep.subr.mxu0 0.0
    %1058 = vmatpush1.msra.mxu0 0.0
    %1059 = vmatprep.subr.mxu0 0.0
    %1060 = vmatpush1.msra.mxu0 0.0
    %1061 = vmatprep.subr.mxu0 0.0
    %1062 = vmatpush1.msra.mxu0 0.0
    %1063 = vmatprep.subr.mxu0 0.0
    %1064 = vmatpush1.msra.mxu0 0.0
    %1065 = vmatprep.subr.mxu0 0.0
    %1066 = vmatpush1.msra.mxu0 0.0
    %1067 = vmatprep.subr.mxu0 0.0
    %1068 = vmatpush1.msra.mxu0 0.0
    %1069 = vmatprep.subr.mxu0 0.0
    %1070 = vmatpush1.msra.mxu0 0.0
    %1071 = vmatprep.subr.mxu0 0.0
    %1072 = vmatpush1.msra.mxu0 0.0
    %1073 = vmatprep.subr.mxu0 0.0
    %1074 = vmatpush1.msra.mxu0 0.0
    %1075 = vmatprep.subr.mxu0 0.0
    %1076 = vmatpush1.msra.mxu0 0.0
    %1077 = vmatprep.subr.mxu0 0.0
    %1078 = vmatpush1.msra.mxu0 0.0
    %1079 = vmatprep.subr.mxu0 0.0
    %1080 = vmatpush1.msra.mxu0 0.0
    %1081 = vmatprep.subr.mxu0 0.0
    %1082 = vmatpush1.msra.mxu0 0.0
    %1083 = vmatprep.subr.mxu0 0.0
    %1084 = vmatpush1.msra.mxu0 0.0
    %1085 = vmatprep.subr.mxu0 0.0
    %1086 = vmatpush1.msra.mxu0 0.0
    %1087 = vmatprep.subr.mxu0 0.0
    %1088 = vmatpush1.msra.mxu0 0.0
    %1089 = vmatprep.subr.mxu0 0.0
    %1090 = vmatpush1.msra.mxu0 0.0
    %1091 = vmatprep.subr.mxu0 0.0
    %1092 = vmatpush1.msra.mxu0 0.0
    %1093 = vmatprep.subr.mxu0 0.0
    %1094 = vmatpush1.msra.mxu0 0.0
    %1095 = vmatprep.mubr.f32.mxu0 0.0
    %1096 = vmatmul.mubr.f32.gmra.mrb[0].mxu0 %v1029
    %v1097 = vpop.f32.mrb[0].mxu0
    %v1098 = vadd.f32 0.0, %v1097
    %v1099 = vpop.f32.mrb[0].mxu0
    %1100 = vdwg.mxu0
    %v1101 = vadd.f32 %v1027, %v1098
    %v1102 = vtanh.pop %v1101
    %s1103 = scalar_lea.vmem [#allocation2], 12
    %v1104 = vld [vmem:[%s1103] ss:$28 sm:$0x3]
    %v1106 = vsel %vm168, %v1102, 0
    %1108 = vmatprep.subr.mxu0 0.0
    %1109 = vmatpush1.msra.mxu0 %v176
    %1110 = vmatprep.subr.mxu0 0.0
    %1111 = vmatpush1.msra.mxu0 %v177
    %1112 = vmatprep.subr.mxu0 0.0
    %1113 = vmatpush1.msra.mxu0 %v178
    %1114 = vmatprep.subr.mxu0 0.0
    %1115 = vmatpush1.msra.mxu0 %v179
    %1116 = vmatprep.subr.mxu0 0.0
    %1117 = vmatpush1.msra.mxu0 0.0
    %1118 = vmatprep.subr.mxu0 0.0
    %1119 = vmatpush1.msra.mxu0 0.0
    %1120 = vmatprep.subr.mxu0 0.0
    %1121 = vmatpush1.msra.mxu0 0.0
    %1122 = vmatprep.subr.mxu0 0.0
    %1123 = vmatpush1.msra.mxu0 0.0
    %1124 = vmatprep.subr.mxu0 0.0
    %1125 = vmatpush1.msra.mxu0 0.0
    %1126 = vmatprep.subr.mxu0 0.0
    %1127 = vmatpush1.msra.mxu0 0.0
    %1128 = vmatprep.subr.mxu0 0.0
    %1129 = vmatpush1.msra.mxu0 0.0
    %1130 = vmatprep.subr.mxu0 0.0
    %1131 = vmatpush1.msra.mxu0 0.0
    %1132 = vmatprep.subr.mxu0 0.0
    %1133 = vmatpush1.msra.mxu0 0.0
    %1134 = vmatprep.subr.mxu0 0.0
    %1135 = vmatpush1.msra.mxu0 0.0
    %1136 = vmatprep.subr.mxu0 0.0
    %1137 = vmatpush1.msra.mxu0 0.0
    %1138 = vmatprep.subr.mxu0 0.0
    %1139 = vmatpush1.msra.mxu0 0.0
    %1140 = vmatprep.subr.mxu0 0.0
    %1141 = vmatpush1.msra.mxu0 0.0
    %1142 = vmatprep.subr.mxu0 0.0
    %1143 = vmatpush1.msra.mxu0 0.0
    %1144 = vmatprep.subr.mxu0 0.0
    %1145 = vmatpush1.msra.mxu0 0.0
    %1146 = vmatprep.subr.mxu0 0.0
    %1147 = vmatpush1.msra.mxu0 0.0
    %1148 = vmatprep.subr.mxu0 0.0
    %1149 = vmatpush1.msra.mxu0 0.0
    %1150 = vmatprep.subr.mxu0 0.0
    %1151 = vmatpush1.msra.mxu0 0.0
    %1152 = vmatprep.subr.mxu0 0.0
    %1153 = vmatpush1.msra.mxu0 0.0
    %1154 = vmatprep.subr.mxu0 0.0
    %1155 = vmatpush1.msra.mxu0 0.0
    %1156 = vmatprep.subr.mxu0 0.0
    %1157 = vmatpush1.msra.mxu0 0.0
    %1158 = vmatprep.subr.mxu0 0.0
    %1159 = vmatpush1.msra.mxu0 0.0
    %1160 = vmatprep.subr.mxu0 0.0
    %1161 = vmatpush1.msra.mxu0 0.0
    %1162 = vmatprep.subr.mxu0 0.0
    %1163 = vmatpush1.msra.mxu0 0.0
    %1164 = vmatprep.subr.mxu0 0.0
    %1165 = vmatpush1.msra.mxu0 0.0
    %1166 = vmatprep.subr.mxu0 0.0
    %1167 = vmatpush1.msra.mxu0 0.0
    %1168 = vmatprep.subr.mxu0 0.0
    %1169 = vmatpush1.msra.mxu0 0.0
    %1170 = vmatprep.subr.mxu0 0.0
    %1171 = vmatpush1.msra.mxu0 0.0
    %1172 = vmatprep.mubr.f32.mxu0 0.0
    %1173 = vmatmul.mubr.f32.gmra.mrb[0].mxu0 %v1106
    %v1174 = vpop.f32.mrb[0].mxu0
    %v1175 = vadd.f32 0.0, %v1174
    %v1176 = vpop.f32.mrb[0].mxu0
    %1177 = vdwg.mxu0
    %v1178 = vadd.f32 %v1104, %v1175
    %v1179 = vtanh.pop %v1178
    %s1180 = scalar_lea.vmem [#allocation2], 13
    %v1181 = vld [vmem:[%s1180] ss:$28 sm:$0x3]
    %v1183 = vsel %vm168, %v1179, 0
    %1185 = vmatprep.subr.mxu0 0.0
    %1186 = vmatpush1.msra.mxu0 %v176
    %1187 = vmatprep.subr.mxu0 0.0
    %1188 = vmatpush1.msra.mxu0 %v177
    %1189 = vmatprep.subr.mxu0 0.0
    %1190 = vmatpush1.msra.mxu0 %v178
    %1191 = vmatprep.subr.mxu0 0.0
    %1192 = vmatpush1.msra.mxu0 %v179
    %1193 = vmatprep.subr.mxu0 0.0
    %1194 = vmatpush1.msra.mxu0 0.0
    %1195 = vmatprep.subr.mxu0 0.0
    %1196 = vmatpush1.msra.mxu0 0.0
    %1197 = vmatprep.subr.mxu0 0.0
    %1198 = vmatpush1.msra.mxu0 0.0
    %1199 = vmatprep.subr.mxu0 0.0
    %1200 = vmatpush1.msra.mxu0 0.0
    %1201 = vmatprep.subr.mxu0 0.0
    %1202 = vmatpush1.msra.mxu0 0.0
    %1203 = vmatprep.subr.mxu0 0.0
    %1204 = vmatpush1.msra.mxu0 0.0
    %1205 = vmatprep.subr.mxu0 0.0
    %1206 = vmatpush1.msra.mxu0 0.0
    %1207 = vmatprep.subr.mxu0 0.0
    %1208 = vmatpush1.msra.mxu0 0.0
    %1209 = vmatprep.subr.mxu0 0.0
    %1210 = vmatpush1.msra.mxu0 0.0
    %1211 = vmatprep.subr.mxu0 0.0
    %1212 = vmatpush1.msra.mxu0 0.0
    %1213 = vmatprep.subr.mxu0 0.0
    %1214 = vmatpush1.msra.mxu0 0.0
    %1215 = vmatprep.subr.mxu0 0.0
    %1216 = vmatpush1.msra.mxu0 0.0
    %1217 = vmatprep.subr.mxu0 0.0
    %1218 = vmatpush1.msra.mxu0 0.0
    %1219 = vmatprep.subr.mxu0 0.0
    %1220 = vmatpush1.msra.mxu0 0.0
    %1221 = vmatprep.subr.mxu0 0.0
    %1222 = vmatpush1.msra.mxu0 0.0
    %1223 = vmatprep.subr.mxu0 0.0
    %1224 = vmatpush1.msra.mxu0 0.0
    %1225 = vmatprep.subr.mxu0 0.0
    %1226 = vmatpush1.msra.mxu0 0.0
    %1227 = vmatprep.subr.mxu0 0.0
    %1228 = vmatpush1.msra.mxu0 0.0
    %1229 = vmatprep.subr.mxu0 0.0
    %1230 = vmatpush1.msra.mxu0 0.0
    %1231 = vmatprep.subr.mxu0 0.0
    %1232 = vmatpush1.msra.mxu0 0.0
    %1233 = vmatprep.subr.mxu0 0.0
    %1234 = vmatpush1.msra.mxu0 0.0
    %1235 = vmatprep.subr.mxu0 0.0
    %1236 = vmatpush1.msra.mxu0 0.0
    %1237 = vmatprep.subr.mxu0 0.0
    %1238 = vmatpush1.msra.mxu0 0.0
    %1239 = vmatprep.subr.mxu0 0.0
    %1240 = vmatpush1.msra.mxu0 0.0
    %1241 = vmatprep.subr.mxu0 0.0
    %1242 = vmatpush1.msra.mxu0 0.0
    %1243 = vmatprep.subr.mxu0 0.0
    %1244 = vmatpush1.msra.mxu0 0.0
    %1245 = vmatprep.subr.mxu0 0.0
    %1246 = vmatpush1.msra.mxu0 0.0
    %1247 = vmatprep.subr.mxu0 0.0
    %1248 = vmatpush1.msra.mxu0 0.0
    %1249 = vmatprep.mubr.f32.mxu0 0.0
    %1250 = vmatmul.mubr.f32.gmra.mrb[0].mxu0 %v1183
    %v1251 = vpop.f32.mrb[0].mxu0
    %v1252 = vadd.f32 0.0, %v1251
    %v1253 = vpop.f32.mrb[0].mxu0
    %1254 = vdwg.mxu0
    %v1255 = vadd.f32 %v1181, %v1252
    %v1256 = vtanh.pop %v1255
    %s1257 = scalar_lea.vmem [#allocation2], 14
    %v1258 = vld [vmem:[%s1257] ss:$28 sm:$0x3]
    %v1260 = vsel %vm168, %v1256, 0
    %1262 = vmatprep.subr.mxu0 0.0
    %1263 = vmatpush1.msra.mxu0 %v176
    %1264 = vmatprep.subr.mxu0 0.0
    %1265 = vmatpush1.msra.mxu0 %v177
    %1266 = vmatprep.subr.mxu0 0.0
    %1267 = vmatpush1.msra.mxu0 %v178
    %1268 = vmatprep.subr.mxu0 0.0
    %1269 = vmatpush1.msra.mxu0 %v179
    %1270 = vmatprep.subr.mxu0 0.0
    %1271 = vmatpush1.msra.mxu0 0.0
    %1272 = vmatprep.subr.mxu0 0.0
    %1273 = vmatpush1.msra.mxu0 0.0
    %1274 = vmatprep.subr.mxu0 0.0
    %1275 = vmatpush1.msra.mxu0 0.0
    %1276 = vmatprep.subr.mxu0 0.0
    %1277 = vmatpush1.msra.mxu0 0.0
    %1278 = vmatprep.subr.mxu0 0.0
    %1279 = vmatpush1.msra.mxu0 0.0
    %1280 = vmatprep.subr.mxu0 0.0
    %1281 = vmatpush1.msra.mxu0 0.0
    %1282 = vmatprep.subr.mxu0 0.0
    %1283 = vmatpush1.msra.mxu0 0.0
    %1284 = vmatprep.subr.mxu0 0.0
    %1285 = vmatpush1.msra.mxu0 0.0
    %1286 = vmatprep.subr.mxu0 0.0
    %1287 = vmatpush1.msra.mxu0 0.0
    %1288 = vmatprep.subr.mxu0 0.0
    %1289 = vmatpush1.msra.mxu0 0.0
    %1290 = vmatprep.subr.mxu0 0.0
    %1291 = vmatpush1.msra.mxu0 0.0
    %1292 = vmatprep.subr.mxu0 0.0
    %1293 = vmatpush1.msra.mxu0 0.0
    %1294 = vmatprep.subr.mxu0 0.0
    %1295 = vmatpush1.msra.mxu0 0.0
    %1296 = vmatprep.subr.mxu0 0.0
    %1297 = vmatpush1.msra.mxu0 0.0
    %1298 = vmatprep.subr.mxu0 0.0
    %1299 = vmatpush1.msra.mxu0 0.0
    %1300 = vmatprep.subr.mxu0 0.0
    %1301 = vmatpush1.msra.mxu0 0.0
    %1302 = vmatprep.subr.mxu0 0.0
    %1303 = vmatpush1.msra.mxu0 0.0
    %1304 = vmatprep.subr.mxu0 0.0
    %1305 = vmatpush1.msra.mxu0 0.0
    %1306 = vmatprep.subr.mxu0 0.0
    %1307 = vmatpush1.msra.mxu0 0.0
    %1308 = vmatprep.subr.mxu0 0.0
    %1309 = vmatpush1.msra.mxu0 0.0
    %1310 = vmatprep.subr.mxu0 0.0
    %1311 = vmatpush1.msra.mxu0 0.0
    %1312 = vmatprep.subr.mxu0 0.0
    %1313 = vmatpush1.msra.mxu0 0.0
    %1314 = vmatprep.subr.mxu0 0.0
    %1315 = vmatpush1.msra.mxu0 0.0
    %1316 = vmatprep.subr.mxu0 0.0
    %1317 = vmatpush1.msra.mxu0 0.0
    %1318 = vmatprep.subr.mxu0 0.0
    %1319 = vmatpush1.msra.mxu0 0.0
    %1320 = vmatprep.subr.mxu0 0.0
    %1321 = vmatpush1.msra.mxu0 0.0
    %1322 = vmatprep.subr.mxu0 0.0
    %1323 = vmatpush1.msra.mxu0 0.0
    %1324 = vmatprep.subr.mxu0 0.0
    %1325 = vmatpush1.msra.mxu0 0.0
    %1326 = vmatprep.mubr.f32.mxu0 0.0
    %1327 = vmatmul.mubr.f32.gmra.mrb[0].mxu0 %v1260
    %v1328 = vpop.f32.mrb[0].mxu0
    %v1329 = vadd.f32 0.0, %v1328
    %v1330 = vpop.f32.mrb[0].mxu0
    %1331 = vdwg.mxu0
    %v1332 = vadd.f32 %v1258, %v1329
    %v1333 = vtanh.pop %v1332
    %s1334 = scalar_lea.vmem [#allocation2], 15
    %v1335 = vld [vmem:[%s1334] ss:$28 sm:$0x3]
    %v1337 = vsel %vm168, %v1333, 0
    %1339 = vmatprep.subr.mxu0 0.0
    %1340 = vmatpush1.msra.mxu0 %v176
    %1341 = vmatprep.subr.mxu0 0.0
    %1342 = vmatpush1.msra.mxu0 %v177
    %1343 = vmatprep.subr.mxu0 0.0
    %1344 = vmatpush1.msra.mxu0 %v178
    %1345 = vmatprep.subr.mxu0 0.0
    %1346 = vmatpush1.msra.mxu0 %v179
    %1347 = vmatprep.subr.mxu0 0.0
    %1348 = vmatpush1.msra.mxu0 0.0
    %1349 = vmatprep.subr.mxu0 0.0
    %1350 = vmatpush1.msra.mxu0 0.0
    %1351 = vmatprep.subr.mxu0 0.0
    %1352 = vmatpush1.msra.mxu0 0.0
    %1353 = vmatprep.subr.mxu0 0.0
    %1354 = vmatpush1.msra.mxu0 0.0
    %1355 = vmatprep.subr.mxu0 0.0
    %1356 = vmatpush1.msra.mxu0 0.0
    %1357 = vmatprep.subr.mxu0 0.0
    %1358 = vmatpush1.msra.mxu0 0.0
    %1359 = vmatprep.subr.mxu0 0.0
    %1360 = vmatpush1.msra.mxu0 0.0
    %1361 = vmatprep.subr.mxu0 0.0
    %1362 = vmatpush1.msra.mxu0 0.0
    %1363 = vmatprep.subr.mxu0 0.0
    %1364 = vmatpush1.msra.mxu0 0.0
    %1365 = vmatprep.subr.mxu0 0.0
    %1366 = vmatpush1.msra.mxu0 0.0
    %1367 = vmatprep.subr.mxu0 0.0
    %1368 = vmatpush1.msra.mxu0 0.0
    %1369 = vmatprep.subr.mxu0 0.0
    %1370 = vmatpush1.msra.mxu0 0.0
    %1371 = vmatprep.subr.mxu0 0.0
    %1372 = vmatpush1.msra.mxu0 0.0
    %1373 = vmatprep.subr.mxu0 0.0
    %1374 = vmatpush1.msra.mxu0 0.0
    %1375 = vmatprep.subr.mxu0 0.0
    %1376 = vmatpush1.msra.mxu0 0.0
    %1377 = vmatprep.subr.mxu0 0.0
    %1378 = vmatpush1.msra.mxu0 0.0
    %1379 = vmatprep.subr.mxu0 0.0
    %1380 = vmatpush1.msra.mxu0 0.0
    %1381 = vmatprep.subr.mxu0 0.0
    %1382 = vmatpush1.msra.mxu0 0.0
    %1383 = vmatprep.subr.mxu0 0.0
    %1384 = vmatpush1.msra.mxu0 0.0
    %1385 = vmatprep.subr.mxu0 0.0
    %1386 = vmatpush1.msra.mxu0 0.0
    %1387 = vmatprep.subr.mxu0 0.0
    %1388 = vmatpush1.msra.mxu0 0.0
    %1389 = vmatprep.subr.mxu0 0.0
    %1390 = vmatpush1.msra.mxu0 0.0
    %1391 = vmatprep.subr.mxu0 0.0
    %1392 = vmatpush1.msra.mxu0 0.0
    %1393 = vmatprep.subr.mxu0 0.0
    %1394 = vmatpush1.msra.mxu0 0.0
    %1395 = vmatprep.subr.mxu0 0.0
    %1396 = vmatpush1.msra.mxu0 0.0
    %1397 = vmatprep.subr.mxu0 0.0
    %1398 = vmatpush1.msra.mxu0 0.0
    %1399 = vmatprep.subr.mxu0 0.0
    %1400 = vmatpush1.msra.mxu0 0.0
    %1401 = vmatprep.subr.mxu0 0.0
    %1402 = vmatpush1.msra.mxu0 0.0
    %1403 = vmatprep.mubr.f32.mxu0 0.0
    %1404 = vmatmul.mubr.f32.gmra.mrb[0].mxu0 %v1337
    %v1405 = vpop.f32.mrb[0].mxu0
    %v1406 = vadd.f32 0.0, %v1405
    %v1407 = vpop.f32.mrb[0].mxu0
    %1408 = vdwg.mxu0
    %v1409 = vadd.f32 %v1335, %v1406
    %v1410 = vtanh.pop %v1409
    %s1411 = scalar_lea.vmem [#allocation2], 16
    %v1412 = vld [vmem:[%s1411] ss:$28 sm:$0x3]
    %v1414 = vsel %vm168, %v1410, 0
    %1416 = vmatprep.subr.mxu0 0.0
    %1417 = vmatpush1.msra.mxu0 %v176
    %1418 = vmatprep.subr.mxu0 0.0
    %1419 = vmatpush1.msra.mxu0 %v177
    %1420 = vmatprep.subr.mxu0 0.0
    %1421 = vmatpush1.msra.mxu0 %v178
    %1422 = vmatprep.subr.mxu0 0.0
    %1423 = vmatpush1.msra.mxu0 %v179
    %1424 = vmatprep.subr.mxu0 0.0
    %1425 = vmatpush1.msra.mxu0 0.0
    %1426 = vmatprep.subr.mxu0 0.0
    %1427 = vmatpush1.msra.mxu0 0.0
    %1428 = vmatprep.subr.mxu0 0.0
    %1429 = vmatpush1.msra.mxu0 0.0
    %1430 = vmatprep.subr.mxu0 0.0
    %1431 = vmatpush1.msra.mxu0 0.0
    %1432 = vmatprep.subr.mxu0 0.0
    %1433 = vmatpush1.msra.mxu0 0.0
    %1434 = vmatprep.subr.mxu0 0.0
    %1435 = vmatpush1.msra.mxu0 0.0
    %1436 = vmatprep.subr.mxu0 0.0
    %1437 = vmatpush1.msra.mxu0 0.0
    %1438 = vmatprep.subr.mxu0 0.0
    %1439 = vmatpush1.msra.mxu0 0.0
    %1440 = vmatprep.subr.mxu0 0.0
    %1441 = vmatpush1.msra.mxu0 0.0
    %1442 = vmatprep.subr.mxu0 0.0
    %1443 = vmatpush1.msra.mxu0 0.0
    %1444 = vmatprep.subr.mxu0 0.0
    %1445 = vmatpush1.msra.mxu0 0.0
    %1446 = vmatprep.subr.mxu0 0.0
    %1447 = vmatpush1.msra.mxu0 0.0
    %1448 = vmatprep.subr.mxu0 0.0
    %1449 = vmatpush1.msra.mxu0 0.0
    %1450 = vmatprep.subr.mxu0 0.0
    %1451 = vmatpush1.msra.mxu0 0.0
    %1452 = vmatprep.subr.mxu0 0.0
    %1453 = vmatpush1.msra.mxu0 0.0
    %1454 = vmatprep.subr.mxu0 0.0
    %1455 = vmatpush1.msra.mxu0 0.0
    %1456 = vmatprep.subr.mxu0 0.0
    %1457 = vmatpush1.msra.mxu0 0.0
    %1458 = vmatprep.subr.mxu0 0.0
    %1459 = vmatpush1.msra.mxu0 0.0
    %1460 = vmatprep.subr.mxu0 0.0
    %1461 = vmatpush1.msra.mxu0 0.0
    %1462 = vmatprep.subr.mxu0 0.0
    %1463 = vmatpush1.msra.mxu0 0.0
    %1464 = vmatprep.subr.mxu0 0.0
    %1465 = vmatpush1.msra.mxu0 0.0
    %1466 = vmatprep.subr.mxu0 0.0
    %1467 = vmatpush1.msra.mxu0 0.0
    %1468 = vmatprep.subr.mxu0 0.0
    %1469 = vmatpush1.msra.mxu0 0.0
    %1470 = vmatprep.subr.mxu0 0.0
    %1471 = vmatpush1.msra.mxu0 0.0
    %1472 = vmatprep.subr.mxu0 0.0
    %1473 = vmatpush1.msra.mxu0 0.0
    %1474 = vmatprep.subr.mxu0 0.0
    %1475 = vmatpush1.msra.mxu0 0.0
    %1476 = vmatprep.subr.mxu0 0.0
    %1477 = vmatpush1.msra.mxu0 0.0
    %1478 = vmatprep.subr.mxu0 0.0
    %1479 = vmatpush1.msra.mxu0 0.0
    %1480 = vmatprep.mubr.f32.mxu0 0.0
    %1481 = vmatmul.mubr.f32.gmra.mrb[0].mxu0 %v1414
    %v1482 = vpop.f32.mrb[0].mxu0
    %v1483 = vadd.f32 0.0, %v1482
    %v1484 = vpop.f32.mrb[0].mxu0
    %1485 = vdwg.mxu0
    %v1486 = vadd.f32 %v1412, %v1483
    %v1487 = vtanh.pop %v1486
    %s1488 = scalar_lea.vmem [#allocation2], 17
    %v1489 = vld [vmem:[%s1488] ss:$28 sm:$0x3]
    %v1491 = vsel %vm168, %v1487, 0
    %1493 = vmatprep.subr.mxu0 0.0
    %1494 = vmatpush1.msra.mxu0 %v176
    %1495 = vmatprep.subr.mxu0 0.0
    %1496 = vmatpush1.msra.mxu0 %v177
    %1497 = vmatprep.subr.mxu0 0.0
    %1498 = vmatpush1.msra.mxu0 %v178
    %1499 = vmatprep.subr.mxu0 0.0
    %1500 = vmatpush1.msra.mxu0 %v179
    %1501 = vmatprep.subr.mxu0 0.0
    %1502 = vmatpush1.msra.mxu0 0.0
    %1503 = vmatprep.subr.mxu0 0.0
    %1504 = vmatpush1.msra.mxu0 0.0
    %1505 = vmatprep.subr.mxu0 0.0
    %1506 = vmatpush1.msra.mxu0 0.0
    %1507 = vmatprep.subr.mxu0 0.0
    %1508 = vmatpush1.msra.mxu0 0.0
    %1509 = vmatprep.subr.mxu0 0.0
    %1510 = vmatpush1.msra.mxu0 0.0
    %1511 = vmatprep.subr.mxu0 0.0
    %1512 = vmatpush1.msra.mxu0 0.0
    %1513 = vmatprep.subr.mxu0 0.0
    %1514 = vmatpush1.msra.mxu0 0.0
    %1515 = vmatprep.subr.mxu0 0.0
    %1516 = vmatpush1.msra.mxu0 0.0
    %1517 = vmatprep.subr.mxu0 0.0
    %1518 = vmatpush1.msra.mxu0 0.0
    %1519 = vmatprep.subr.mxu0 0.0
    %1520 = vmatpush1.msra.mxu0 0.0
    %1521 = vmatprep.subr.mxu0 0.0
    %1522 = vmatpush1.msra.mxu0 0.0
    %1523 = vmatprep.subr.mxu0 0.0
    %1524 = vmatpush1.msra.mxu0 0.0
    %1525 = vmatprep.subr.mxu0 0.0
    %1526 = vmatpush1.msra.mxu0 0.0
    %1527 = vmatprep.subr.mxu0 0.0
    %1528 = vmatpush1.msra.mxu0 0.0
    %1529 = vmatprep.subr.mxu0 0.0
    %1530 = vmatpush1.msra.mxu0 0.0
    %1531 = vmatprep.subr.mxu0 0.0
    %1532 = vmatpush1.msra.mxu0 0.0
    %1533 = vmatprep.subr.mxu0 0.0
    %1534 = vmatpush1.msra.mxu0 0.0
    %1535 = vmatprep.subr.mxu0 0.0
    %1536 = vmatpush1.msra.mxu0 0.0
    %1537 = vmatprep.subr.mxu0 0.0
    %1538 = vmatpush1.msra.mxu0 0.0
    %1539 = vmatprep.subr.mxu0 0.0
    %1540 = vmatpush1.msra.mxu0 0.0
    %1541 = vmatprep.subr.mxu0 0.0
    %1542 = vmatpush1.msra.mxu0 0.0
    %1543 = vmatprep.subr.mxu0 0.0
    %1544 = vmatpush1.msra.mxu0 0.0
    %1545 = vmatprep.subr.mxu0 0.0
    %1546 = vmatpush1.msra.mxu0 0.0
    %1547 = vmatprep.subr.mxu0 0.0
    %1548 = vmatpush1.msra.mxu0 0.0
    %1549 = vmatprep.subr.mxu0 0.0
    %1550 = vmatpush1.msra.mxu0 0.0
    %1551 = vmatprep.subr.mxu0 0.0
    %1552 = vmatpush1.msra.mxu0 0.0
    %1553 = vmatprep.subr.mxu0 0.0
    %1554 = vmatpush1.msra.mxu0 0.0
    %1555 = vmatprep.subr.mxu0 0.0
    %1556 = vmatpush1.msra.mxu0 0.0
    %1557 = vmatprep.mubr.f32.mxu0 0.0
    %1558 = vmatmul.mubr.f32.gmra.mrb[0].mxu0 %v1491
    %v1559 = vpop.f32.mrb[0].mxu0
    %v1560 = vadd.f32 0.0, %v1559
    %v1561 = vpop.f32.mrb[0].mxu0
    %1562 = vdwg.mxu0
    %v1563 = vadd.f32 %v1489, %v1560
    %v1564 = vtanh.pop %v1563
    %s1565 = scalar_lea.vmem [#allocation2], 18
    %v1566 = vld [vmem:[%s1565] ss:$28 sm:$0x3]
    %v1568 = vsel %vm168, %v1564, 0
    %1570 = vmatprep.subr.mxu0 0.0
    %1571 = vmatpush1.msra.mxu0 %v176
    %1572 = vmatprep.subr.mxu0 0.0
    %1573 = vmatpush1.msra.mxu0 %v177
    %1574 = vmatprep.subr.mxu0 0.0
    %1575 = vmatpush1.msra.mxu0 %v178
    %1576 = vmatprep.subr.mxu0 0.0
    %1577 = vmatpush1.msra.mxu0 %v179
    %1578 = vmatprep.subr.mxu0 0.0
    %1579 = vmatpush1.msra.mxu0 0.0
    %1580 = vmatprep.subr.mxu0 0.0
    %1581 = vmatpush1.msra.mxu0 0.0
    %1582 = vmatprep.subr.mxu0 0.0
    %1583 = vmatpush1.msra.mxu0 0.0
    %1584 = vmatprep.subr.mxu0 0.0
    %1585 = vmatpush1.msra.mxu0 0.0
    %1586 = vmatprep.subr.mxu0 0.0
    %1587 = vmatpush1.msra.mxu0 0.0
    %1588 = vmatprep.subr.mxu0 0.0
    %1589 = vmatpush1.msra.mxu0 0.0
    %1590 = vmatprep.subr.mxu0 0.0
    %1591 = vmatpush1.msra.mxu0 0.0
    %1592 = vmatprep.subr.mxu0 0.0
    %1593 = vmatpush1.msra.mxu0 0.0
    %1594 = vmatprep.subr.mxu0 0.0
    %1595 = vmatpush1.msra.mxu0 0.0
    %1596 = vmatprep.subr.mxu0 0.0
    %1597 = vmatpush1.msra.mxu0 0.0
    %1598 = vmatprep.subr.mxu0 0.0
    %1599 = vmatpush1.msra.mxu0 0.0
    %1600 = vmatprep.subr.mxu0 0.0
    %1601 = vmatpush1.msra.mxu0 0.0
    %1602 = vmatprep.subr.mxu0 0.0
    %1603 = vmatpush1.msra.mxu0 0.0
    %1604 = vmatprep.subr.mxu0 0.0
    %1605 = vmatpush1.msra.mxu0 0.0
    %1606 = vmatprep.subr.mxu0 0.0
    %1607 = vmatpush1.msra.mxu0 0.0
    %1608 = vmatprep.subr.mxu0 0.0
    %1609 = vmatpush1.msra.mxu0 0.0
    %1610 = vmatprep.subr.mxu0 0.0
    %1611 = vmatpush1.msra.mxu0 0.0
    %1612 = vmatprep.subr.mxu0 0.0
    %1613 = vmatpush1.msra.mxu0 0.0
    %1614 = vmatprep.subr.mxu0 0.0
    %1615 = vmatpush1.msra.mxu0 0.0
    %1616 = vmatprep.subr.mxu0 0.0
    %1617 = vmatpush1.msra.mxu0 0.0
    %1618 = vmatprep.subr.mxu0 0.0
    %1619 = vmatpush1.msra.mxu0 0.0
    %1620 = vmatprep.subr.mxu0 0.0
    %1621 = vmatpush1.msra.mxu0 0.0
    %1622 = vmatprep.subr.mxu0 0.0
    %1623 = vmatpush1.msra.mxu0 0.0
    %1624 = vmatprep.subr.mxu0 0.0
    %1625 = vmatpush1.msra.mxu0 0.0
    %1626 = vmatprep.subr.mxu0 0.0
    %1627 = vmatpush1.msra.mxu0 0.0
    %1628 = vmatprep.subr.mxu0 0.0
    %1629 = vmatpush1.msra.mxu0 0.0
    %1630 = vmatprep.subr.mxu0 0.0
    %1631 = vmatpush1.msra.mxu0 0.0
    %1632 = vmatprep.subr.mxu0 0.0
    %1633 = vmatpush1.msra.mxu0 0.0
    %1634 = vmatprep.mubr.f32.mxu0 0.0
    %1635 = vmatmul.mubr.f32.gmra.mrb[0].mxu0 %v1568
    %v1636 = vpop.f32.mrb[0].mxu0
    %v1637 = vadd.f32 0.0, %v1636
    %v1638 = vpop.f32.mrb[0].mxu0
    %1639 = vdwg.mxu0
    %v1640 = vadd.f32 %v1566, %v1637
    %v1641 = vtanh.pop %v1640
    %s1642 = scalar_lea.vmem [#allocation2], 19
    %v1643 = vld [vmem:[%s1642] ss:$28 sm:$0x3]
    %v1645 = vsel %vm168, %v1641, 0
    %1647 = vmatprep.subr.mxu0 0.0
    %1648 = vmatpush1.msra.mxu0 %v176
    %1649 = vmatprep.subr.mxu0 0.0
    %1650 = vmatpush1.msra.mxu0 %v177
    %1651 = vmatprep.subr.mxu0 0.0
    %1652 = vmatpush1.msra.mxu0 %v178
    %1653 = vmatprep.subr.mxu0 0.0
    %1654 = vmatpush1.msra.mxu0 %v179
    %1655 = vmatprep.subr.mxu0 0.0
    %1656 = vmatpush1.msra.mxu0 0.0
    %1657 = vmatprep.subr.mxu0 0.0
    %1658 = vmatpush1.msra.mxu0 0.0
    %1659 = vmatprep.subr.mxu0 0.0
    %1660 = vmatpush1.msra.mxu0 0.0
    %1661 = vmatprep.subr.mxu0 0.0
    %1662 = vmatpush1.msra.mxu0 0.0
    %1663 = vmatprep.subr.mxu0 0.0
    %1664 = vmatpush1.msra.mxu0 0.0
    %1665 = vmatprep.subr.mxu0 0.0
    %1666 = vmatpush1.msra.mxu0 0.0
    %1667 = vmatprep.subr.mxu0 0.0
    %1668 = vmatpush1.msra.mxu0 0.0
    %1669 = vmatprep.subr.mxu0 0.0
    %1670 = vmatpush1.msra.mxu0 0.0
    %1671 = vmatprep.subr.mxu0 0.0
    %1672 = vmatpush1.msra.mxu0 0.0
    %1673 = vmatprep.subr.mxu0 0.0
    %1674 = vmatpush1.msra.mxu0 0.0
    %1675 = vmatprep.subr.mxu0 0.0
    %1676 = vmatpush1.msra.mxu0 0.0
    %1677 = vmatprep.subr.mxu0 0.0
    %1678 = vmatpush1.msra.mxu0 0.0
    %1679 = vmatprep.subr.mxu0 0.0
    %1680 = vmatpush1.msra.mxu0 0.0
    %1681 = vmatprep.subr.mxu0 0.0
    %1682 = vmatpush1.msra.mxu0 0.0
    %1683 = vmatprep.subr.mxu0 0.0
    %1684 = vmatpush1.msra.mxu0 0.0
    %1685 = vmatprep.subr.mxu0 0.0
    %1686 = vmatpush1.msra.mxu0 0.0
    %1687 = vmatprep.subr.mxu0 0.0
    %1688 = vmatpush1.msra.mxu0 0.0
    %1689 = vmatprep.subr.mxu0 0.0
    %1690 = vmatpush1.msra.mxu0 0.0
    %1691 = vmatprep.subr.mxu0 0.0
    %1692 = vmatpush1.msra.mxu0 0.0
    %1693 = vmatprep.subr.mxu0 0.0
    %1694 = vmatpush1.msra.mxu0 0.0
    %1695 = vmatprep.subr.mxu0 0.0
    %1696 = vmatpush1.msra.mxu0 0.0
    %1697 = vmatprep.subr.mxu0 0.0
    %1698 = vmatpush1.msra.mxu0 0.0
    %1699 = vmatprep.subr.mxu0 0.0
    %1700 = vmatpush1.msra.mxu0 0.0
    %1701 = vmatprep.subr.mxu0 0.0
    %1702 = vmatpush1.msra.mxu0 0.0
    %1703 = vmatprep.subr.mxu0 0.0
    %1704 = vmatpush1.msra.mxu0 0.0
    %1705 = vmatprep.subr.mxu0 0.0
    %1706 = vmatpush1.msra.mxu0 0.0
    %1707 = vmatprep.subr.mxu0 0.0
    %1708 = vmatpush1.msra.mxu0 0.0
    %1709 = vmatprep.subr.mxu0 0.0
    %1710 = vmatpush1.msra.mxu0 0.0
    %1711 = vmatprep.mubr.f32.mxu0 0.0
    %1712 = vmatmul.mubr.f32.gmra.mrb[0].mxu0 %v1645
    %v1713 = vpop.f32.mrb[0].mxu0
    %v1714 = vadd.f32 0.0, %v1713
    %v1715 = vpop.f32.mrb[0].mxu0
    %1716 = vdwg.mxu0
    %v1717 = vadd.f32 %v1643, %v1714
    %v1718 = vtanh.pop %v1717
    %s1719 = scalar_lea.vmem [#allocation2], 20
    %v1720 = vld [vmem:[%s1719] ss:$28 sm:$0x3]
    %v1722 = vsel %vm168, %v1718, 0
    %1724 = vmatprep.subr.mxu0 0.0
    %1725 = vmatpush1.msra.mxu0 %v176
    %1726 = vmatprep.subr.mxu0 0.0
    %1727 = vmatpush1.msra.mxu0 %v177
    %1728 = vmatprep.subr.mxu0 0.0
    %1729 = vmatpush1.msra.mxu0 %v178
    %1730 = vmatprep.subr.mxu0 0.0
    %1731 = vmatpush1.msra.mxu0 %v179
    %1732 = vmatprep.subr.mxu0 0.0
    %1733 = vmatpush1.msra.mxu0 0.0
    %1734 = vmatprep.subr.mxu0 0.0
    %1735 = vmatpush1.msra.mxu0 0.0
    %1736 = vmatprep.subr.mxu0 0.0
    %1737 = vmatpush1.msra.mxu0 0.0
    %1738 = vmatprep.subr.mxu0 0.0
    %1739 = vmatpush1.msra.mxu0 0.0
    %1740 = vmatprep.subr.mxu0 0.0
    %1741 = vmatpush1.msra.mxu0 0.0
    %1742 = vmatprep.subr.mxu0 0.0
    %1743 = vmatpush1.msra.mxu0 0.0
    %1744 = vmatprep.subr.mxu0 0.0
    %1745 = vmatpush1.msra.mxu0 0.0
    %1746 = vmatprep.subr.mxu0 0.0
    %1747 = vmatpush1.msra.mxu0 0.0
    %1748 = vmatprep.subr.mxu0 0.0
    %1749 = vmatpush1.msra.mxu0 0.0
    %1750 = vmatprep.subr.mxu0 0.0
    %1751 = vmatpush1.msra.mxu0 0.0
    %1752 = vmatprep.subr.mxu0 0.0
    %1753 = vmatpush1.msra.mxu0 0.0
    %1754 = vmatprep.subr.mxu0 0.0
    %1755 = vmatpush1.msra.mxu0 0.0
    %1756 = vmatprep.subr.mxu0 0.0
    %1757 = vmatpush1.msra.mxu0 0.0
    %1758 = vmatprep.subr.mxu0 0.0
    %1759 = vmatpush1.msra.mxu0 0.0
    %1760 = vmatprep.subr.mxu0 0.0
    %1761 = vmatpush1.msra.mxu0 0.0
    %1762 = vmatprep.subr.mxu0 0.0
    %1763 = vmatpush1.msra.mxu0 0.0
    %1764 = vmatprep.subr.mxu0 0.0
    %1765 = vmatpush1.msra.mxu0 0.0
    %1766 = vmatprep.subr.mxu0 0.0
    %1767 = vmatpush1.msra.mxu0 0.0
    %1768 = vmatprep.subr.mxu0 0.0
    %1769 = vmatpush1.msra.mxu0 0.0
    %1770 = vmatprep.subr.mxu0 0.0
    %1771 = vmatpush1.msra.mxu0 0.0
    %1772 = vmatprep.subr.mxu0 0.0
    %1773 = vmatpush1.msra.mxu0 0.0
    %1774 = vmatprep.subr.mxu0 0.0
    %1775 = vmatpush1.msra.mxu0 0.0
    %1776 = vmatprep.subr.mxu0 0.0
    %1777 = vmatpush1.msra.mxu0 0.0
    %1778 = vmatprep.subr.mxu0 0.0
    %1779 = vmatpush1.msra.mxu0 0.0
    %1780 = vmatprep.subr.mxu0 0.0
    %1781 = vmatpush1.msra.mxu0 0.0
    %1782 = vmatprep.subr.mxu0 0.0
    %1783 = vmatpush1.msra.mxu0 0.0
    %1784 = vmatprep.subr.mxu0 0.0
    %1785 = vmatpush1.msra.mxu0 0.0
    %1786 = vmatprep.subr.mxu0 0.0
    %1787 = vmatpush1.msra.mxu0 0.0
    %1788 = vmatprep.mubr.f32.mxu0 0.0
    %1789 = vmatmul.mubr.f32.gmra.mrb[0].mxu0 %v1722
    %v1790 = vpop.f32.mrb[0].mxu0
    %v1791 = vadd.f32 0.0, %v1790
    %v1792 = vpop.f32.mrb[0].mxu0
    %1793 = vdwg.mxu0
    %v1794 = vadd.f32 %v1720, %v1791
    %v1795 = vtanh.pop %v1794
    %s1796 = scalar_lea.vmem [#allocation2], 21
    %v1797 = vld [vmem:[%s1796] ss:$28 sm:$0x3]
    %v1799 = vsel %vm168, %v1795, 0
    %1801 = vmatprep.subr.mxu0 0.0
    %1802 = vmatpush1.msra.mxu0 %v176
    %1803 = vmatprep.subr.mxu0 0.0
    %1804 = vmatpush1.msra.mxu0 %v177
    %1805 = vmatprep.subr.mxu0 0.0
    %1806 = vmatpush1.msra.mxu0 %v178
    %1807 = vmatprep.subr.mxu0 0.0
    %1808 = vmatpush1.msra.mxu0 %v179
    %1809 = vmatprep.subr.mxu0 0.0
    %1810 = vmatpush1.msra.mxu0 0.0
    %1811 = vmatprep.subr.mxu0 0.0
    %1812 = vmatpush1.msra.mxu0 0.0
    %1813 = vmatprep.subr.mxu0 0.0
    %1814 = vmatpush1.msra.mxu0 0.0
    %1815 = vmatprep.subr.mxu0 0.0
    %1816 = vmatpush1.msra.mxu0 0.0
    %1817 = vmatprep.subr.mxu0 0.0
    %1818 = vmatpush1.msra.mxu0 0.0
    %1819 = vmatprep.subr.mxu0 0.0
    %1820 = vmatpush1.msra.mxu0 0.0
    %1821 = vmatprep.subr.mxu0 0.0
    %1822 = vmatpush1.msra.mxu0 0.0
    %1823 = vmatprep.subr.mxu0 0.0
    %1824 = vmatpush1.msra.mxu0 0.0
    %1825 = vmatprep.subr.mxu0 0.0
    %1826 = vmatpush1.msra.mxu0 0.0
    %1827 = vmatprep.subr.mxu0 0.0
    %1828 = vmatpush1.msra.mxu0 0.0
    %1829 = vmatprep.subr.mxu0 0.0
    %1830 = vmatpush1.msra.mxu0 0.0
    %1831 = vmatprep.subr.mxu0 0.0
    %1832 = vmatpush1.msra.mxu0 0.0
    %1833 = vmatprep.subr.mxu0 0.0
    %1834 = vmatpush1.msra.mxu0 0.0
    %1835 = vmatprep.subr.mxu0 0.0
    %1836 = vmatpush1.msra.mxu0 0.0
    %1837 = vmatprep.subr.mxu0 0.0
    %1838 = vmatpush1.msra.mxu0 0.0
    %1839 = vmatprep.subr.mxu0 0.0
    %1840 = vmatpush1.msra.mxu0 0.0
    %1841 = vmatprep.subr.mxu0 0.0
    %1842 = vmatpush1.msra.mxu0 0.0
    %1843 = vmatprep.subr.mxu0 0.0
    %1844 = vmatpush1.msra.mxu0 0.0
    %1845 = vmatprep.subr.mxu0 0.0
    %1846 = vmatpush1.msra.mxu0 0.0
    %1847 = vmatprep.subr.mxu0 0.0
    %1848 = vmatpush1.msra.mxu0 0.0
    %1849 = vmatprep.subr.mxu0 0.0
    %1850 = vmatpush1.msra.mxu0 0.0
    %1851 = vmatprep.subr.mxu0 0.0
    %1852 = vmatpush1.msra.mxu0 0.0
    %1853 = vmatprep.subr.mxu0 0.0
    %1854 = vmatpush1.msra.mxu0 0.0
    %1855 = vmatprep.subr.mxu0 0.0
    %1856 = vmatpush1.msra.mxu0 0.0
    %1857 = vmatprep.subr.mxu0 0.0
    %1858 = vmatpush1.msra.mxu0 0.0
    %1859 = vmatprep.subr.mxu0 0.0
    %1860 = vmatpush1.msra.mxu0 0.0
    %1861 = vmatprep.subr.mxu0 0.0
    %1862 = vmatpush1.msra.mxu0 0.0
    %1863 = vmatprep.subr.mxu0 0.0
    %1864 = vmatpush1.msra.mxu0 0.0
    %1865 = vmatprep.mubr.f32.mxu0 0.0
    %1866 = vmatmul.mubr.f32.gmra.mrb[0].mxu0 %v1799
    %v1867 = vpop.f32.mrb[0].mxu0
    %v1868 = vadd.f32 0.0, %v1867
    %v1869 = vpop.f32.mrb[0].mxu0
    %1870 = vdwg.mxu0
    %v1871 = vadd.f32 %v1797, %v1868
    %v1872 = vtanh.pop %v1871
    %s1873 = scalar_lea.vmem [#allocation2], 22
    %v1874 = vld [vmem:[%s1873] ss:$28 sm:$0x3]
    %v1876 = vsel %vm168, %v1872, 0
    %1878 = vmatprep.subr.mxu0 0.0
    %1879 = vmatpush1.msra.mxu0 %v176
    %1880 = vmatprep.subr.mxu0 0.0
    %1881 = vmatpush1.msra.mxu0 %v177
    %1882 = vmatprep.subr.mxu0 0.0
    %1883 = vmatpush1.msra.mxu0 %v178
    %1884 = vmatprep.subr.mxu0 0.0
    %1885 = vmatpush1.msra.mxu0 %v179
    %1886 = vmatprep.subr.mxu0 0.0
    %1887 = vmatpush1.msra.mxu0 0.0
    %1888 = vmatprep.subr.mxu0 0.0
    %1889 = vmatpush1.msra.mxu0 0.0
    %1890 = vmatprep.subr.mxu0 0.0
    %1891 = vmatpush1.msra.mxu0 0.0
    %1892 = vmatprep.subr.mxu0 0.0
    %1893 = vmatpush1.msra.mxu0 0.0
    %1894 = vmatprep.subr.mxu0 0.0
    %1895 = vmatpush1.msra.mxu0 0.0
    %1896 = vmatprep.subr.mxu0 0.0
    %1897 = vmatpush1.msra.mxu0 0.0
    %1898 = vmatprep.subr.mxu0 0.0
    %1899 = vmatpush1.msra.mxu0 0.0
    %1900 = vmatprep.subr.mxu0 0.0
    %1901 = vmatpush1.msra.mxu0 0.0
    %1902 = vmatprep.subr.mxu0 0.0
    %1903 = vmatpush1.msra.mxu0 0.0
    %1904 = vmatprep.subr.mxu0 0.0
    %1905 = vmatpush1.msra.mxu0 0.0
    %1906 = vmatprep.subr.mxu0 0.0
    %1907 = vmatpush1.msra.mxu0 0.0
    %1908 = vmatprep.subr.mxu0 0.0
    %1909 = vmatpush1.msra.mxu0 0.0
    %1910 = vmatprep.subr.mxu0 0.0
    %1911 = vmatpush1.msra.mxu0 0.0
    %1912 = vmatprep.subr.mxu0 0.0
    %1913 = vmatpush1.msra.mxu0 0.0
    %1914 = vmatprep.subr.mxu0 0.0
    %1915 = vmatpush1.msra.mxu0 0.0
    %1916 = vmatprep.subr.mxu0 0.0
    %1917 = vmatpush1.msra.mxu0 0.0
    %1918 = vmatprep.subr.mxu0 0.0
    %1919 = vmatpush1.msra.mxu0 0.0
    %1920 = vmatprep.subr.mxu0 0.0
    %1921 = vmatpush1.msra.mxu0 0.0
    %1922 = vmatprep.subr.mxu0 0.0
    %1923 = vmatpush1.msra.mxu0 0.0
    %1924 = vmatprep.subr.mxu0 0.0
    %1925 = vmatpush1.msra.mxu0 0.0
    %1926 = vmatprep.subr.mxu0 0.0
    %1927 = vmatpush1.msra.mxu0 0.0
    %1928 = vmatprep.subr.mxu0 0.0
    %1929 = vmatpush1.msra.mxu0 0.0
    %1930 = vmatprep.subr.mxu0 0.0
    %1931 = vmatpush1.msra.mxu0 0.0
    %1932 = vmatprep.subr.mxu0 0.0
    %1933 = vmatpush1.msra.mxu0 0.0
    %1934 = vmatprep.subr.mxu0 0.0
    %1935 = vmatpush1.msra.mxu0 0.0
    %1936 = vmatprep.subr.mxu0 0.0
    %1937 = vmatpush1.msra.mxu0 0.0
    %1938 = vmatprep.subr.mxu0 0.0
    %1939 = vmatpush1.msra.mxu0 0.0
    %1940 = vmatprep.subr.mxu0 0.0
    %1941 = vmatpush1.msra.mxu0 0.0
    %1942 = vmatprep.mubr.f32.mxu0 0.0
    %1943 = vmatmul.mubr.f32.gmra.mrb[0].mxu0 %v1876
    %v1944 = vpop.f32.mrb[0].mxu0
    %v1945 = vadd.f32 0.0, %v1944
    %v1946 = vpop.f32.mrb[0].mxu0
    %1947 = vdwg.mxu0
    %v1948 = vadd.f32 %v1874, %v1945
    %v1949 = vtanh.pop %v1948
    %s1950 = scalar_lea.vmem [#allocation2], 23
    %v1951 = vld [vmem:[%s1950] ss:$28 sm:$0x3]
    %v1953 = vsel %vm168, %v1949, 0
    %1955 = vmatprep.subr.mxu0 0.0
    %1956 = vmatpush1.msra.mxu0 %v176
    %1957 = vmatprep.subr.mxu0 0.0
    %1958 = vmatpush1.msra.mxu0 %v177
    %1959 = vmatprep.subr.mxu0 0.0
    %1960 = vmatpush1.msra.mxu0 %v178
    %1961 = vmatprep.subr.mxu0 0.0
    %1962 = vmatpush1.msra.mxu0 %v179
    %1963 = vmatprep.subr.mxu0 0.0
    %1964 = vmatpush1.msra.mxu0 0.0
    %1965 = vmatprep.subr.mxu0 0.0
    %1966 = vmatpush1.msra.mxu0 0.0
    %1967 = vmatprep.subr.mxu0 0.0
    %1968 = vmatpush1.msra.mxu0 0.0
    %1969 = vmatprep.subr.mxu0 0.0
    %1970 = vmatpush1.msra.mxu0 0.0
    %1971 = vmatprep.subr.mxu0 0.0
    %1972 = vmatpush1.msra.mxu0 0.0
    %1973 = vmatprep.subr.mxu0 0.0
    %1974 = vmatpush1.msra.mxu0 0.0
    %1975 = vmatprep.subr.mxu0 0.0
    %1976 = vmatpush1.msra.mxu0 0.0
    %1977 = vmatprep.subr.mxu0 0.0
    %1978 = vmatpush1.msra.mxu0 0.0
    %1979 = vmatprep.subr.mxu0 0.0
    %1980 = vmatpush1.msra.mxu0 0.0
    %1981 = vmatprep.subr.mxu0 0.0
    %1982 = vmatpush1.msra.mxu0 0.0
    %1983 = vmatprep.subr.mxu0 0.0
    %1984 = vmatpush1.msra.mxu0 0.0
    %1985 = vmatprep.subr.mxu0 0.0
    %1986 = vmatpush1.msra.mxu0 0.0
    %1987 = vmatprep.subr.mxu0 0.0
    %1988 = vmatpush1.msra.mxu0 0.0
    %1989 = vmatprep.subr.mxu0 0.0
    %1990 = vmatpush1.msra.mxu0 0.0
    %1991 = vmatprep.subr.mxu0 0.0
    %1992 = vmatpush1.msra.mxu0 0.0
    %1993 = vmatprep.subr.mxu0 0.0
    %1994 = vmatpush1.msra.mxu0 0.0
    %1995 = vmatprep.subr.mxu0 0.0
    %1996 = vmatpush1.msra.mxu0 0.0
    %1997 = vmatprep.subr.mxu0 0.0
    %1998 = vmatpush1.msra.mxu0 0.0
    %1999 = vmatprep.subr.mxu0 0.0
    %2000 = vmatpush1.msra.mxu0 0.0
    %2001 = vmatprep.subr.mxu0 0.0
    %2002 = vmatpush1.msra.mxu0 0.0
    %2003 = vmatprep.subr.mxu0 0.0
    %2004 = vmatpush1.msra.mxu0 0.0
    %2005 = vmatprep.subr.mxu0 0.0
    %2006 = vmatpush1.msra.mxu0 0.0
    %2007 = vmatprep.subr.mxu0 0.0
    %2008 = vmatpush1.msra.mxu0 0.0
    %2009 = vmatprep.subr.mxu0 0.0
    %2010 = vmatpush1.msra.mxu0 0.0
    %2011 = vmatprep.subr.mxu0 0.0
    %2012 = vmatpush1.msra.mxu0 0.0
    %2013 = vmatprep.subr.mxu0 0.0
    %2014 = vmatpush1.msra.mxu0 0.0
    %2015 = vmatprep.subr.mxu0 0.0
    %2016 = vmatpush1.msra.mxu0 0.0
    %2017 = vmatprep.subr.mxu0 0.0
    %2018 = vmatpush1.msra.mxu0 0.0
    %2019 = vmatprep.mubr.f32.mxu0 0.0
    %2020 = vmatmul.mubr.f32.gmra.mrb[0].mxu0 %v1953
    %v2021 = vpop.f32.mrb[0].mxu0
    %v2022 = vadd.f32 0.0, %v2021
    %v2023 = vpop.f32.mrb[0].mxu0
    %2024 = vdwg.mxu0
    %v2025 = vadd.f32 %v1951, %v2022
    %v2026 = vtanh.pop %v2025
    %s2027 = scalar_lea.vmem [#allocation2], 24
    %v2028 = vld [vmem:[%s2027] ss:$28 sm:$0x3]
    %v2030 = vsel %vm168, %v2026, 0
    %2032 = vmatprep.subr.mxu0 0.0
    %2033 = vmatpush1.msra.mxu0 %v176
    %2034 = vmatprep.subr.mxu0 0.0
    %2035 = vmatpush1.msra.mxu0 %v177
    %2036 = vmatprep.subr.mxu0 0.0
    %2037 = vmatpush1.msra.mxu0 %v178
    %2038 = vmatprep.subr.mxu0 0.0
    %2039 = vmatpush1.msra.mxu0 %v179
    %2040 = vmatprep.subr.mxu0 0.0
    %2041 = vmatpush1.msra.mxu0 0.0
    %2042 = vmatprep.subr.mxu0 0.0
    %2043 = vmatpush1.msra.mxu0 0.0
    %2044 = vmatprep.subr.mxu0 0.0
    %2045 = vmatpush1.msra.mxu0 0.0
    %2046 = vmatprep.subr.mxu0 0.0
    %2047 = vmatpush1.msra.mxu0 0.0
    %2048 = vmatprep.subr.mxu0 0.0
    %2049 = vmatpush1.msra.mxu0 0.0
    %2050 = vmatprep.subr.mxu0 0.0
    %2051 = vmatpush1.msra.mxu0 0.0
    %2052 = vmatprep.subr.mxu0 0.0
    %2053 = vmatpush1.msra.mxu0 0.0
    %2054 = vmatprep.subr.mxu0 0.0
    %2055 = vmatpush1.msra.mxu0 0.0
    %2056 = vmatprep.subr.mxu0 0.0
    %2057 = vmatpush1.msra.mxu0 0.0
    %2058 = vmatprep.subr.mxu0 0.0
    %2059 = vmatpush1.msra.mxu0 0.0
    %2060 = vmatprep.subr.mxu0 0.0
    %2061 = vmatpush1.msra.mxu0 0.0
    %2062 = vmatprep.subr.mxu0 0.0
    %2063 = vmatpush1.msra.mxu0 0.0
    %2064 = vmatprep.subr.mxu0 0.0
    %2065 = vmatpush1.msra.mxu0 0.0
    %2066 = vmatprep.subr.mxu0 0.0
    %2067 = vmatpush1.msra.mxu0 0.0
    %2068 = vmatprep.subr.mxu0 0.0
    %2069 = vmatpush1.msra.mxu0 0.0
    %2070 = vmatprep.subr.mxu0 0.0
    %2071 = vmatpush1.msra.mxu0 0.0
    %2072 = vmatprep.subr.mxu0 0.0
    %2073 = vmatpush1.msra.mxu0 0.0
    %2074 = vmatprep.subr.mxu0 0.0
    %2075 = vmatpush1.msra.mxu0 0.0
    %2076 = vmatprep.subr.mxu0 0.0
    %2077 = vmatpush1.msra.mxu0 0.0
    %2078 = vmatprep.subr.mxu0 0.0
    %2079 = vmatpush1.msra.mxu0 0.0
    %2080 = vmatprep.subr.mxu0 0.0
    %2081 = vmatpush1.msra.mxu0 0.0
    %2082 = vmatprep.subr.mxu0 0.0
    %2083 = vmatpush1.msra.mxu0 0.0
    %2084 = vmatprep.subr.mxu0 0.0
    %2085 = vmatpush1.msra.mxu0 0.0
    %2086 = vmatprep.subr.mxu0 0.0
    %2087 = vmatpush1.msra.mxu0 0.0
    %2088 = vmatprep.subr.mxu0 0.0
    %2089 = vmatpush1.msra.mxu0 0.0
    %2090 = vmatprep.subr.mxu0 0.0
    %2091 = vmatpush1.msra.mxu0 0.0
    %2092 = vmatprep.subr.mxu0 0.0
    %2093 = vmatpush1.msra.mxu0 0.0
    %2094 = vmatprep.subr.mxu0 0.0
    %2095 = vmatpush1.msra.mxu0 0.0
    %2096 = vmatprep.mubr.f32.mxu0 0.0
    %2097 = vmatmul.mubr.f32.gmra.mrb[0].mxu0 %v2030
    %v2098 = vpop.f32.mrb[0].mxu0
    %v2099 = vadd.f32 0.0, %v2098
    %v2100 = vpop.f32.mrb[0].mxu0
    %2101 = vdwg.mxu0
    %v2102 = vadd.f32 %v2028, %v2099
    %v2103 = vtanh.pop %v2102
    %s2104 = scalar_lea.vmem [#allocation2], 25
    %v2105 = vld [vmem:[%s2104] ss:$28 sm:$0x3]
    %v2107 = vsel %vm168, %v2103, 0
    %2109 = vmatprep.subr.mxu0 0.0
    %2110 = vmatpush1.msra.mxu0 %v176
    %2111 = vmatprep.subr.mxu0 0.0
    %2112 = vmatpush1.msra.mxu0 %v177
    %2113 = vmatprep.subr.mxu0 0.0
    %2114 = vmatpush1.msra.mxu0 %v178
    %2115 = vmatprep.subr.mxu0 0.0
    %2116 = vmatpush1.msra.mxu0 %v179
    %2117 = vmatprep.subr.mxu0 0.0
    %2118 = vmatpush1.msra.mxu0 0.0
    %2119 = vmatprep.subr.mxu0 0.0
    %2120 = vmatpush1.msra.mxu0 0.0
    %2121 = vmatprep.subr.mxu0 0.0
    %2122 = vmatpush1.msra.mxu0 0.0
    %2123 = vmatprep.subr.mxu0 0.0
    %2124 = vmatpush1.msra.mxu0 0.0
    %2125 = vmatprep.subr.mxu0 0.0
    %2126 = vmatpush1.msra.mxu0 0.0
    %2127 = vmatprep.subr.mxu0 0.0
    %2128 = vmatpush1.msra.mxu0 0.0
    %2129 = vmatprep.subr.mxu0 0.0
    %2130 = vmatpush1.msra.mxu0 0.0
    %2131 = vmatprep.subr.mxu0 0.0
    %2132 = vmatpush1.msra.mxu0 0.0
    %2133 = vmatprep.subr.mxu0 0.0
    %2134 = vmatpush1.msra.mxu0 0.0
    %2135 = vmatprep.subr.mxu0 0.0
    %2136 = vmatpush1.msra.mxu0 0.0
    %2137 = vmatprep.subr.mxu0 0.0
    %2138 = vmatpush1.msra.mxu0 0.0
    %2139 = vmatprep.subr.mxu0 0.0
    %2140 = vmatpush1.msra.mxu0 0.0
    %2141 = vmatprep.subr.mxu0 0.0
    %2142 = vmatpush1.msra.mxu0 0.0
    %2143 = vmatprep.subr.mxu0 0.0
    %2144 = vmatpush1.msra.mxu0 0.0
    %2145 = vmatprep.subr.mxu0 0.0
    %2146 = vmatpush1.msra.mxu0 0.0
    %2147 = vmatprep.subr.mxu0 0.0
    %2148 = vmatpush1.msra.mxu0 0.0
    %2149 = vmatprep.subr.mxu0 0.0
    %2150 = vmatpush1.msra.mxu0 0.0
    %2151 = vmatprep.subr.mxu0 0.0
    %2152 = vmatpush1.msra.mxu0 0.0
    %2153 = vmatprep.subr.mxu0 0.0
    %2154 = vmatpush1.msra.mxu0 0.0
    %2155 = vmatprep.subr.mxu0 0.0
    %2156 = vmatpush1.msra.mxu0 0.0
    %2157 = vmatprep.subr.mxu0 0.0
    %2158 = vmatpush1.msra.mxu0 0.0
    %2159 = vmatprep.subr.mxu0 0.0
    %2160 = vmatpush1.msra.mxu0 0.0
    %2161 = vmatprep.subr.mxu0 0.0
    %2162 = vmatpush1.msra.mxu0 0.0
    %2163 = vmatprep.subr.mxu0 0.0
    %2164 = vmatpush1.msra.mxu0 0.0
    %2165 = vmatprep.subr.mxu0 0.0
    %2166 = vmatpush1.msra.mxu0 0.0
    %2167 = vmatprep.subr.mxu0 0.0
    %2168 = vmatpush1.msra.mxu0 0.0
    %2169 = vmatprep.subr.mxu0 0.0
    %2170 = vmatpush1.msra.mxu0 0.0
    %2171 = vmatprep.subr.mxu0 0.0
    %2172 = vmatpush1.msra.mxu0 0.0
    %2173 = vmatprep.mubr.f32.mxu0 0.0
    %2174 = vmatmul.mubr.f32.gmra.mrb[0].mxu0 %v2107
    %v2175 = vpop.f32.mrb[0].mxu0
    %v2176 = vadd.f32 0.0, %v2175
    %v2177 = vpop.f32.mrb[0].mxu0
    %2178 = vdwg.mxu0
    %v2179 = vadd.f32 %v2105, %v2176
    %v2180 = vtanh.pop %v2179
    %s2181 = scalar_lea.vmem [#allocation2], 26
    %v2182 = vld [vmem:[%s2181] ss:$28 sm:$0x3]
    %v2184 = vsel %vm168, %v2180, 0
    %2186 = vmatprep.subr.mxu0 0.0
    %2187 = vmatpush1.msra.mxu0 %v176
    %2188 = vmatprep.subr.mxu0 0.0
    %2189 = vmatpush1.msra.mxu0 %v177
    %2190 = vmatprep.subr.mxu0 0.0
    %2191 = vmatpush1.msra.mxu0 %v178
    %2192 = vmatprep.subr.mxu0 0.0
    %2193 = vmatpush1.msra.mxu0 %v179
    %2194 = vmatprep.subr.mxu0 0.0
    %2195 = vmatpush1.msra.mxu0 0.0
    %2196 = vmatprep.subr.mxu0 0.0
    %2197 = vmatpush1.msra.mxu0 0.0
    %2198 = vmatprep.subr.mxu0 0.0
    %2199 = vmatpush1.msra.mxu0 0.0
    %2200 = vmatprep.subr.mxu0 0.0
    %2201 = vmatpush1.msra.mxu0 0.0
    %2202 = vmatprep.subr.mxu0 0.0
    %2203 = vmatpush1.msra.mxu0 0.0
    %2204 = vmatprep.subr.mxu0 0.0
    %2205 = vmatpush1.msra.mxu0 0.0
    %2206 = vmatprep.subr.mxu0 0.0
    %2207 = vmatpush1.msra.mxu0 0.0
    %2208 = vmatprep.subr.mxu0 0.0
    %2209 = vmatpush1.msra.mxu0 0.0
    %2210 = vmatprep.subr.mxu0 0.0
    %2211 = vmatpush1.msra.mxu0 0.0
    %2212 = vmatprep.subr.mxu0 0.0
    %2213 = vmatpush1.msra.mxu0 0.0
    %2214 = vmatprep.subr.mxu0 0.0
    %2215 = vmatpush1.msra.mxu0 0.0
    %2216 = vmatprep.subr.mxu0 0.0
    %2217 = vmatpush1.msra.mxu0 0.0
    %2218 = vmatprep.subr.mxu0 0.0
    %2219 = vmatpush1.msra.mxu0 0.0
    %2220 = vmatprep.subr.mxu0 0.0
    %2221 = vmatpush1.msra.mxu0 0.0
    %2222 = vmatprep.subr.mxu0 0.0
    %2223 = vmatpush1.msra.mxu0 0.0
    %2224 = vmatprep.subr.mxu0 0.0
    %2225 = vmatpush1.msra.mxu0 0.0
    %2226 = vmatprep.subr.mxu0 0.0
    %2227 = vmatpush1.msra.mxu0 0.0
    %2228 = vmatprep.subr.mxu0 0.0
    %2229 = vmatpush1.msra.mxu0 0.0
    %2230 = vmatprep.subr.mxu0 0.0
    %2231 = vmatpush1.msra.mxu0 0.0
    %2232 = vmatprep.subr.mxu0 0.0
    %2233 = vmatpush1.msra.mxu0 0.0
    %2234 = vmatprep.subr.mxu0 0.0
    %2235 = vmatpush1.msra.mxu0 0.0
    %2236 = vmatprep.subr.mxu0 0.0
    %2237 = vmatpush1.msra.mxu0 0.0
    %2238 = vmatprep.subr.mxu0 0.0
    %2239 = vmatpush1.msra.mxu0 0.0
    %2240 = vmatprep.subr.mxu0 0.0
    %2241 = vmatpush1.msra.mxu0 0.0
    %2242 = vmatprep.subr.mxu0 0.0
    %2243 = vmatpush1.msra.mxu0 0.0
    %2244 = vmatprep.subr.mxu0 0.0
    %2245 = vmatpush1.msra.mxu0 0.0
    %2246 = vmatprep.subr.mxu0 0.0
    %2247 = vmatpush1.msra.mxu0 0.0
    %2248 = vmatprep.subr.mxu0 0.0
    %2249 = vmatpush1.msra.mxu0 0.0
    %2250 = vmatprep.mubr.f32.mxu0 0.0
    %2251 = vmatmul.mubr.f32.gmra.mrb[0].mxu0 %v2184
    %v2252 = vpop.f32.mrb[0].mxu0
    %v2253 = vadd.f32 0.0, %v2252
    %v2254 = vpop.f32.mrb[0].mxu0
    %2255 = vdwg.mxu0
    %v2256 = vadd.f32 %v2182, %v2253
    %v2257 = vtanh.pop %v2256
    %s2258 = scalar_lea.vmem [#allocation2], 27
    %v2259 = vld [vmem:[%s2258] ss:$28 sm:$0x3]
    %v2261 = vsel %vm168, %v2257, 0
    %2263 = vmatprep.subr.mxu0 0.0
    %2264 = vmatpush1.msra.mxu0 %v176
    %2265 = vmatprep.subr.mxu0 0.0
    %2266 = vmatpush1.msra.mxu0 %v177
    %2267 = vmatprep.subr.mxu0 0.0
    %2268 = vmatpush1.msra.mxu0 %v178
    %2269 = vmatprep.subr.mxu0 0.0
    %2270 = vmatpush1.msra.mxu0 %v179
    %2271 = vmatprep.subr.mxu0 0.0
    %2272 = vmatpush1.msra.mxu0 0.0
    %2273 = vmatprep.subr.mxu0 0.0
    %2274 = vmatpush1.msra.mxu0 0.0
    %2275 = vmatprep.subr.mxu0 0.0
    %2276 = vmatpush1.msra.mxu0 0.0
    %2277 = vmatprep.subr.mxu0 0.0
    %2278 = vmatpush1.msra.mxu0 0.0
    %2279 = vmatprep.subr.mxu0 0.0
    %2280 = vmatpush1.msra.mxu0 0.0
    %2281 = vmatprep.subr.mxu0 0.0
    %2282 = vmatpush1.msra.mxu0 0.0
    %2283 = vmatprep.subr.mxu0 0.0
    %2284 = vmatpush1.msra.mxu0 0.0
    %2285 = vmatprep.subr.mxu0 0.0
    %2286 = vmatpush1.msra.mxu0 0.0
    %2287 = vmatprep.subr.mxu0 0.0
    %2288 = vmatpush1.msra.mxu0 0.0
    %2289 = vmatprep.subr.mxu0 0.0
    %2290 = vmatpush1.msra.mxu0 0.0
    %2291 = vmatprep.subr.mxu0 0.0
    %2292 = vmatpush1.msra.mxu0 0.0
    %2293 = vmatprep.subr.mxu0 0.0
    %2294 = vmatpush1.msra.mxu0 0.0
    %2295 = vmatprep.subr.mxu0 0.0
    %2296 = vmatpush1.msra.mxu0 0.0
    %2297 = vmatprep.subr.mxu0 0.0
    %2298 = vmatpush1.msra.mxu0 0.0
    %2299 = vmatprep.subr.mxu0 0.0
    %2300 = vmatpush1.msra.mxu0 0.0
    %2301 = vmatprep.subr.mxu0 0.0
    %2302 = vmatpush1.msra.mxu0 0.0
    %2303 = vmatprep.subr.mxu0 0.0
    %2304 = vmatpush1.msra.mxu0 0.0
    %2305 = vmatprep.subr.mxu0 0.0
    %2306 = vmatpush1.msra.mxu0 0.0
    %2307 = vmatprep.subr.mxu0 0.0
    %2308 = vmatpush1.msra.mxu0 0.0
    %2309 = vmatprep.subr.mxu0 0.0
    %2310 = vmatpush1.msra.mxu0 0.0
    %2311 = vmatprep.subr.mxu0 0.0
    %2312 = vmatpush1.msra.mxu0 0.0
    %2313 = vmatprep.subr.mxu0 0.0
    %2314 = vmatpush1.msra.mxu0 0.0
    %2315 = vmatprep.subr.mxu0 0.0
    %2316 = vmatpush1.msra.mxu0 0.0
    %2317 = vmatprep.subr.mxu0 0.0
    %2318 = vmatpush1.msra.mxu0 0.0
    %2319 = vmatprep.subr.mxu0 0.0
    %2320 = vmatpush1.msra.mxu0 0.0
    %2321 = vmatprep.subr.mxu0 0.0
    %2322 = vmatpush1.msra.mxu0 0.0
    %2323 = vmatprep.subr.mxu0 0.0
    %2324 = vmatpush1.msra.mxu0 0.0
    %2325 = vmatprep.subr.mxu0 0.0
    %2326 = vmatpush1.msra.mxu0 0.0
    %2327 = vmatprep.mubr.f32.mxu0 0.0
    %2328 = vmatmul.mubr.f32.gmra.mrb[0].mxu0 %v2261
    %v2329 = vpop.f32.mrb[0].mxu0
    %v2330 = vadd.f32 0.0, %v2329
    %v2331 = vpop.f32.mrb[0].mxu0
    %2332 = vdwg.mxu0
    %v2333 = vadd.f32 %v2259, %v2330
    %v2334 = vtanh.pop %v2333
    %v2335 = vld [vmem:[%s4] sm:$0xff]
    %v2336 = vld [vmem:[%s4 + $0x8] sm:$0xff]
    %v2337 = vld [vmem:[%s4 + $0x10] sm:$0xff]
    %v2338 = vld [vmem:[%s4 + $0x18] sm:$0xff]
    %v2339 = vld [vmem:[%s5] sm:$0x1]
    %v2341 = vlaneseq
    %v2342 = vshrl.u32 %v2341, 7
    %v2343 = vsub.s32 0, %v2342
    %v2344 = vrot.slane %v2339, %v2343
    %v2347 = vsel %vm168, %v2334, 0
    %2349 = vmatprep.subr.mxu0 0.0
    %2350 = vmatpush1.msra.mxu0 %v2335
    %2351 = vmatprep.subr.mxu0 0.0
    %2352 = vmatpush1.msra.mxu0 %v2336
    %2353 = vmatprep.subr.mxu0 0.0
    %2354 = vmatpush1.msra.mxu0 %v2337
    %2355 = vmatprep.subr.mxu0 0.0
    %2356 = vmatpush1.msra.mxu0 %v2338
    %2357 = vmatprep.subr.mxu0 0.0
    %2358 = vmatpush1.msra.mxu0 0.0
    %2359 = vmatprep.subr.mxu0 0.0
    %2360 = vmatpush1.msra.mxu0 0.0
    %2361 = vmatprep.subr.mxu0 0.0
    %2362 = vmatpush1.msra.mxu0 0.0
    %2363 = vmatprep.subr.mxu0 0.0
    %2364 = vmatpush1.msra.mxu0 0.0
    %2365 = vmatprep.subr.mxu0 0.0
    %2366 = vmatpush1.msra.mxu0 0.0
    %2367 = vmatprep.subr.mxu0 0.0
    %2368 = vmatpush1.msra.mxu0 0.0
    %2369 = vmatprep.subr.mxu0 0.0
    %2370 = vmatpush1.msra.mxu0 0.0
    %2371 = vmatprep.subr.mxu0 0.0
    %2372 = vmatpush1.msra.mxu0 0.0
    %2373 = vmatprep.subr.mxu0 0.0
    %2374 = vmatpush1.msra.mxu0 0.0
    %2375 = vmatprep.subr.mxu0 0.0
    %2376 = vmatpush1.msra.mxu0 0.0
    %2377 = vmatprep.subr.mxu0 0.0
    %2378 = vmatpush1.msra.mxu0 0.0
    %2379 = vmatprep.subr.mxu0 0.0
    %2380 = vmatpush1.msra.mxu0 0.0
    %2381 = vmatprep.subr.mxu0 0.0
    %2382 = vmatpush1.msra.mxu0 0.0
    %2383 = vmatprep.subr.mxu0 0.0
    %2384 = vmatpush1.msra.mxu0 0.0
    %2385 = vmatprep.subr.mxu0 0.0
    %2386 = vmatpush1.msra.mxu0 0.0
    %2387 = vmatprep.subr.mxu0 0.0
    %2388 = vmatpush1.msra.mxu0 0.0
    %2389 = vmatprep.subr.mxu0 0.0
    %2390 = vmatpush1.msra.mxu0 0.0
    %2391 = vmatprep.subr.mxu0 0.0
    %2392 = vmatpush1.msra.mxu0 0.0
    %2393 = vmatprep.subr.mxu0 0.0
    %2394 = vmatpush1.msra.mxu0 0.0
    %2395 = vmatprep.subr.mxu0 0.0
    %2396 = vmatpush1.msra.mxu0 0.0
    %2397 = vmatprep.subr.mxu0 0.0
    %2398 = vmatpush1.msra.mxu0 0.0
    %2399 = vmatprep.subr.mxu0 0.0
    %2400 = vmatpush1.msra.mxu0 0.0
    %2401 = vmatprep.subr.mxu0 0.0
    %2402 = vmatpush1.msra.mxu0 0.0
    %2403 = vmatprep.subr.mxu0 0.0
    %2404 = vmatpush1.msra.mxu0 0.0
    %2405 = vmatprep.subr.mxu0 0.0
    %2406 = vmatpush1.msra.mxu0 0.0
    %2407 = vmatprep.subr.mxu0 0.0
    %2408 = vmatpush1.msra.mxu0 0.0
    %2409 = vmatprep.subr.mxu0 0.0
    %2410 = vmatpush1.msra.mxu0 0.0
    %2411 = vmatprep.subr.mxu0 0.0
    %2412 = vmatpush1.msra.mxu0 0.0
    %2413 = vmatprep.mubr.f32.mxu0 0.0
    %2414 = vmatmul.mubr.f32.gmra.mrb[0].mxu0 %v2347
    %v2415 = vpop.f32.mrb[0].mxu0
    %v2416 = vadd.f32 %v2344, %v2415
    %v2417 = vpop.f32.mrb[0].mxu0
    %2418 = vdwg.mxu0
    %vm2419 = vcmask 74752
    %2420 = vst.msk [vmem:[#allocation3] sm:$0x3] %vm2419, %v2416
    // Predicated region
    $region26: #{rnn_forward.1} parent=1 // pred_check
      _
    $region27: #{rnn_forward.1} parent=1 // pred_check_branch
      %2422 = sbr.rel (0) target = $region29
    $region28: #{rnn_forward.1} parent=1 // pred_region
      %s2424 = ssub.s32 32, 32
      %2425 = vsyncadd [#allocation4], %s2424
      %s2427 = sshll.u32 [#allocation3], 4
      %s2428 = int_to_ptr.vmem [resolvable:$true] %s2427
      %2430 = dma.vmem_to_hbm [thread:$0]  %s2428, 32, %s6, [#allocation4]
    $region29: #{rnn_forward.1} parent=1 // pred_fallthru
      _
    // Predicated region
    $region30: #{rnn_forward.1} parent=1 // pred_check
      _
    $region31: #{rnn_forward.1} parent=1 // pred_check_branch
      %2432 = sbr.rel (0) target = $region33
    $region32: #{rnn_forward.1} parent=1 // pred_region
      %2433 = dma.done [#allocation4], 32
    $region33: #{rnn_forward.1} parent=1 // pred_fallthru
      _
    %2434 = vsyncpa [#allocation4], 1

</llo_original>
